<compile_context>
chip_gen: v5e
topology: v5e:2x2
jax: 0.10.0
libtpu: 0.0.40
codegen_flags: <defaults>
</compile_context>

<pallas_src>
import functools

import jax
import jax.numpy as jnp
from jax.experimental import pallas as pl
from jax.experimental.pallas import tpu as pltpu


C_PAD = 128   # conv output channels padded to a full lane width
E_PAD = 128   # embedding padded to a full lane width (sliced back to embed_size outside)


# ----------------------------------------------------------------------------
# Fused kernel: in-kernel im2col conv stem -> bias/ReLU -> avg-pool (as matmul)
#               -> fc -> bias -> ReLU -> dropout(0.5) via precomputed mask.
# One grid step == one image.
# ----------------------------------------------------------------------------
def _encoder_kernel(x_ref, wc_ref, bc_ref, wf_ref, bf_ref, mask_ref, o_ref, *, h, w, cin):
    # x_ref:    (1, H+2, W+2, Cin)  padded NHWC image
    # wc_ref:   (9, Cin, C_PAD)     folded 3x3 conv weights (zero-padded channels)
    # bc_ref:   (1, C_PAD)
    # wf_ref:   (C_PAD, E_PAD)      fc weights (zero-padded)
    # bf_ref:   (1, E_PAD)
    # mask_ref: (1, 1, E_PAD)       inverted-dropout keep mask (0.0 or 1/(1-p))
    # o_ref:    (1, 1, E_PAD)
    x = x_ref[0]                                   # (H+2, W+2, Cin)
    hw = h * w

    # --- conv stem: im2col done in-kernel via 9 shifted windows, 9 MXU dots ---
    acc = jnp.zeros((hw, C_PAD), jnp.float32)
    for ky in range(3):
        for kx in range(3):
            win = x[ky:ky + h, kx:kx + w, :].reshape(hw, cin)          # (H*W, Cin)
            acc = acc + jnp.dot(win, wc_ref[ky * 3 + kx],
                                preferred_element_type=jnp.float32)    # (H*W, C_PAD)
    act = jnp.maximum(acc + bc_ref[...], 0.0)                          # bias + ReLU

    # --- global average pool as a matmul (rides the MXU, not the XLU) ---
    pool_w = jnp.full((1, hw), 1.0 / hw, dtype=jnp.float32)
    pooled = jnp.dot(pool_w, act, preferred_element_type=jnp.float32)  # (1, C_PAD)

    # --- modified inception.fc + ReLU + Dropout(0.5) (inverted dropout) ---
    logits = jnp.dot(pooled, wf_ref[...], preferred_element_type=jnp.float32) + bf_ref[...]
    feat = jnp.maximum(logits, 0.0)
    o_ref[0] = feat * mask_ref[0]                                      # lane-dense (1, E_PAD) store


def _encoder_pallas(x_pad, wc, bc, wf, bf, keep_mask):
    n, hp, wp, cin = x_pad.shape
    h, w = hp - 2, wp - 2

    kernel = functools.partial(_encoder_kernel, h=h, w=w, cin=cin)

    flops = n * (2 * h * w * 9 * cin * C_PAD      # conv stem
                 + 2 * h * w * C_PAD              # pool matmul
                 + 2 * C_PAD * E_PAD)             # fc
    bytes_accessed = 4 * (x_pad.size + wc.size + bc.size + wf.size + bf.size
                          + keep_mask.size + n * E_PAD)

    return pl.pallas_call(
        kernel,
        out_shape=jax.ShapeDtypeStruct((n, 1, E_PAD), jnp.float32),
        grid_spec=pltpu.PrefetchScalarGridSpec(
            num_scalar_prefetch=0,
            grid=(n,),
            in_specs=[
                pl.BlockSpec((1, hp, wp, cin), lambda i: (i, 0, 0, 0)),   # per-image padded input
                pl.BlockSpec((9, cin, C_PAD), lambda i: (0, 0, 0)),       # conv weights (resident)
                pl.BlockSpec((1, C_PAD), lambda i: (0, 0)),               # conv bias
                pl.BlockSpec((C_PAD, E_PAD), lambda i: (0, 0)),           # fc weights (resident)
                pl.BlockSpec((1, E_PAD), lambda i: (0, 0)),               # fc bias
                pl.BlockSpec((1, 1, E_PAD), lambda i: (i, 0, 0)),         # dropout keep mask
            ],
            out_specs=pl.BlockSpec((1, 1, E_PAD), lambda i: (i, 0, 0)),
        ),
        compiler_params=pltpu.CompilerParams(
            dimension_semantics=("parallel",),          # batch axis -> both TCs on v7x
            vmem_limit_bytes=32 * 1024 * 1024,
        ),
        cost_estimate=pl.CostEstimate(
            flops=flops, transcendentals=0, bytes_accessed=bytes_accessed),
    )(x_pad, wc, bc, wf, bf, keep_mask)


# ----------------------------------------------------------------------------
# Wrapper: layout prep (NCHW -> padded NHWC, weight folding, lane padding) + call
# ----------------------------------------------------------------------------
@functools.partial(jax.jit, static_argnames=("embed_size", "training"))
def encoder_forward(images, w_conv, b_conv, w_fc, b_fc, dropout_key, *,
                    embed_size, training=True):
    n, cin, h, w = images.shape
    cout = w_conv.shape[0]

    # NCHW -> NHWC, 1-pixel halo for the 3x3 / stride 1 / pad 1 stem (no 9x im2col blowup).
    x = jnp.transpose(images, (0, 2, 3, 1))
    x_pad = jnp.pad(x, ((0, 0), (1, 1), (1, 1), (0, 0)))

    # PyTorch conv weight (Cout, Cin, 3, 3) -> (9, Cin, C_PAD), zero-padded output channels.
    wc = jnp.transpose(w_conv, (2, 3, 1, 0)).reshape(9, cin, cout)
    wc = jnp.pad(wc, ((0, 0), (0, 0), (0, C_PAD - cout)))
    bc = jnp.pad(b_conv.reshape(1, cout), ((0, 0), (0, C_PAD - cout)))

    # fc (in_features=cout, embed_size) -> (C_PAD, E_PAD), zero padding keeps semantics exact.
    wf = jnp.pad(w_fc, ((0, C_PAD - cout), (0, E_PAD - embed_size)))
    bf = jnp.pad(b_fc.reshape(1, embed_size), ((0, 0), (0, E_PAD - embed_size)))

    # nn.Dropout(0.5), training-mode (module default).  Mask precomputed with jax.random so
    # the kernel lowers on all platforms (pltpu.prng_* is not available in interpret mode).
    if training:
        keep = jax.random.bernoulli(dropout_key, 0.5, (n, 1, E_PAD)).astype(jnp.float32) * 2.0
    else:
        keep = jnp.ones((n, 1, E_PAD), jnp.float32)

    out_pad = _encoder_pallas(x_pad, wc, bc, wf, bf, keep)   # (N, 1, E_PAD)
    return out_pad[:, 0, :embed_size]


# ----------------------------------------------------------------------------
# Pure-JAX reference (same math) for a correctness self-check.
# ----------------------------------------------------------------------------
def _reference_forward(images, w_conv, b_conv, w_fc, b_fc, dropout_key, embed_size):
    n = images.shape[0]
    x = jnp.transpose(images, (0, 2, 3, 1))
    conv = jax.lax.conv_general_dilated(
        x, jnp.transpose(w_conv, (2, 3, 1, 0)),
        window_strides=(1, 1), padding="SAME",
        dimension_numbers=("NHWC", "HWIO", "NHWC"))
    act = jnp.maximum(conv + b_conv.reshape(1, 1, 1, -1), 0.0)
    pooled = act.mean(axis=(1, 2))
    feat = jnp.maximum(pooled @ w_fc + b_fc.reshape(1, -1), 0.0)
    keep = jax.random.bernoulli(dropout_key, 0.5, (n, 1, E_PAD)).astype(jnp.float32) * 2.0
    return feat * keep[:, 0, :embed_size]


if __name__ == "__main__":
    # Small deterministic shapes consistent with Encoder.forward (NCHW images, embed_size=32).
    N, CIN, H, W = 2, 3, 16, 16
    COUT, E = 32, 32

    key = jax.random.PRNGKey(0)
    k1, k2, k3, k4, k5, kdrop = jax.random.split(key, 6)

    images = jax.random.normal(k1, (N, CIN, H, W), dtype=jnp.float32)
    w_conv = 0.1 * jax.random.normal(k2, (COUT, CIN, 3, 3), dtype=jnp.float32)  # PyTorch layout
    b_conv = 0.1 * jax.random.normal(k3, (COUT,), dtype=jnp.float32)
    w_fc = 0.1 * jax.random.normal(k4, (COUT, E), dtype=jnp.float32)            # (in_features, embed)
    b_fc = 0.1 * jax.random.normal(k5, (E,), dtype=jnp.float32)

    out = encoder_forward(images, w_conv, b_conv, w_fc, b_fc, kdrop,
                          embed_size=E, training=True)
    jax.block_until_ready(out)

    assert out.shape == (N, E) and out.dtype == jnp.float32
    ref = _reference_forward(images, w_conv, b_conv, w_fc, b_fc, kdrop, E)
    assert bool(jnp.allclose(out, ref, atol=1e-2, rtol=1e-2)), "mismatch vs pure-JAX reference"
    print("KERNEL_OK")
</pallas_src>

<mosaic_0001>
module attributes {stable_mosaic.version = 11 : i64} {
  func.func @_encoder_kernel(%arg0: i32, %arg1: memref<1x18x18x3xf32, #tpu.memory_space<vmem>>, %arg2: memref<9x3x128xf32, #tpu.memory_space<vmem>>, %arg3: memref<1x128xf32, #tpu.memory_space<vmem>>, %arg4: memref<128x128xf32, #tpu.memory_space<vmem>>, %arg5: memref<1x128xf32, #tpu.memory_space<vmem>>, %arg6: memref<1x1x128xf32, #tpu.memory_space<vmem>>, %arg7: memref<1x1x128xf32, #tpu.memory_space<vmem>>) attributes {dimension_semantics = [#tpu.dimension_semantics<parallel>], iteration_bounds = array<i64: 2>, scalar_prefetch = 0 : i64, scratch_operands = 0 : i64, tpu.core_type = #tpu.core_type<tc>, window_params = [{transform_indices = @transform_0, window_bounds = array<i64: 1, 18, 18, 3>}, {pipeline_mode = #tpu.pipeline_mode<synchronous>, transform_indices = @transform_1, window_bounds = array<i64: 9, 3, 128>}, {pipeline_mode = #tpu.pipeline_mode<synchronous>, transform_indices = @transform_2, window_bounds = array<i64: 1, 128>}, {pipeline_mode = #tpu.pipeline_mode<synchronous>, transform_indices = @transform_3, window_bounds = array<i64: 128, 128>}, {pipeline_mode = #tpu.pipeline_mode<synchronous>, transform_indices = @transform_4, window_bounds = array<i64: 1, 128>}, {transform_indices = @transform_5, window_bounds = array<i64: 1, 1, 128>}, {transform_indices = @transform_6, window_bounds = array<i64: 1, 1, 128>}]} {
    %c0 = arith.constant 0 : index
    %c0_0 = arith.constant 0 : index
    %c0_1 = arith.constant 0 : index
    %c0_2 = arith.constant 0 : index
    %0 = vector.load %arg1[%c0, %c0_0, %c0_1, %c0_2] : memref<1x18x18x3xf32, #tpu.memory_space<vmem>>, vector<1x18x18x3xf32>
    %1 = vector.shape_cast %0 : vector<1x18x18x3xf32> to vector<18x18x3xf32>
    %cst = arith.constant 0.000000e+00 : f32
    %2 = vector.broadcast %cst : f32 to vector<256x128xf32>
    %3 = vector.extract_strided_slice %1 {offsets = [0, 0, 0], sizes = [16, 16, 3], strides = [1, 1, 1]} : vector<18x18x3xf32> to vector<16x16x3xf32>
    %4 = vector.shape_cast %3 : vector<16x16x3xf32> to vector<256x3xf32>
    %c0_3 = arith.constant 0 : index
    %c0_4 = arith.constant 0 : index
    %c0_5 = arith.constant 0 : index
    %5 = vector.load %arg2[%c0_3, %c0_4, %c0_5] : memref<9x3x128xf32, #tpu.memory_space<vmem>>, vector<1x3x128xf32>
    %6 = vector.shape_cast %5 : vector<1x3x128xf32> to vector<3x128xf32>
    %cst_6 = arith.constant dense<0.000000e+00> : vector<256x128xf32>
    %7 = tpu.matmul %4, %6, %cst_6 {dimension_numbers = #tpu.dot_dimension_numbers<[1], [0], [0], [1], [0, 0, 1, 1], [], []>} : vector<256x3xf32>, vector<3x128xf32>, vector<256x128xf32> -> vector<256x128xf32>
    %8 = arith.addf %2, %7 : vector<256x128xf32>
    %9 = vector.extract_strided_slice %1 {offsets = [0, 1, 0], sizes = [16, 16, 3], strides = [1, 1, 1]} : vector<18x18x3xf32> to vector<16x16x3xf32>
    %10 = vector.shape_cast %9 : vector<16x16x3xf32> to vector<256x3xf32>
    %c1 = arith.constant 1 : index
    %c0_7 = arith.constant 0 : index
    %c0_8 = arith.constant 0 : index
    %11 = vector.load %arg2[%c1, %c0_7, %c0_8] : memref<9x3x128xf32, #tpu.memory_space<vmem>>, vector<1x3x128xf32>
    %12 = vector.shape_cast %11 : vector<1x3x128xf32> to vector<3x128xf32>
    %cst_9 = arith.constant dense<0.000000e+00> : vector<256x128xf32>
    %13 = tpu.matmul %10, %12, %cst_9 {dimension_numbers = #tpu.dot_dimension_numbers<[1], [0], [0], [1], [0, 0, 1, 1], [], []>} : vector<256x3xf32>, vector<3x128xf32>, vector<256x128xf32> -> vector<256x128xf32>
    %14 = arith.addf %8, %13 : vector<256x128xf32>
    %15 = vector.extract_strided_slice %1 {offsets = [0, 2, 0], sizes = [16, 16, 3], strides = [1, 1, 1]} : vector<18x18x3xf32> to vector<16x16x3xf32>
    %16 = vector.shape_cast %15 : vector<16x16x3xf32> to vector<256x3xf32>
    %c2 = arith.constant 2 : index
    %c0_10 = arith.constant 0 : index
    %c0_11 = arith.constant 0 : index
    %17 = vector.load %arg2[%c2, %c0_10, %c0_11] : memref<9x3x128xf32, #tpu.memory_space<vmem>>, vector<1x3x128xf32>
    %18 = vector.shape_cast %17 : vector<1x3x128xf32> to vector<3x128xf32>
    %cst_12 = arith.constant dense<0.000000e+00> : vector<256x128xf32>
    %19 = tpu.matmul %16, %18, %cst_12 {dimension_numbers = #tpu.dot_dimension_numbers<[1], [0], [0], [1], [0, 0, 1, 1], [], []>} : vector<256x3xf32>, vector<3x128xf32>, vector<256x128xf32> -> vector<256x128xf32>
    %20 = arith.addf %14, %19 : vector<256x128xf32>
    %21 = vector.extract_strided_slice %1 {offsets = [1, 0, 0], sizes = [16, 16, 3], strides = [1, 1, 1]} : vector<18x18x3xf32> to vector<16x16x3xf32>
    %22 = vector.shape_cast %21 : vector<16x16x3xf32> to vector<256x3xf32>
    %c3 = arith.constant 3 : index
    %c0_13 = arith.constant 0 : index
    %c0_14 = arith.constant 0 : index
    %23 = vector.load %arg2[%c3, %c0_13, %c0_14] : memref<9x3x128xf32, #tpu.memory_space<vmem>>, vector<1x3x128xf32>
    %24 = vector.shape_cast %23 : vector<1x3x128xf32> to vector<3x128xf32>
    %cst_15 = arith.constant dense<0.000000e+00> : vector<256x128xf32>
    %25 = tpu.matmul %22, %24, %cst_15 {dimension_numbers = #tpu.dot_dimension_numbers<[1], [0], [0], [1], [0, 0, 1, 1], [], []>} : vector<256x3xf32>, vector<3x128xf32>, vector<256x128xf32> -> vector<256x128xf32>
    %26 = arith.addf %20, %25 : vector<256x128xf32>
    %27 = vector.extract_strided_slice %1 {offsets = [1, 1, 0], sizes = [16, 16, 3], strides = [1, 1, 1]} : vector<18x18x3xf32> to vector<16x16x3xf32>
    %28 = vector.shape_cast %27 : vector<16x16x3xf32> to vector<256x3xf32>
    %c4 = arith.constant 4 : index
    %c0_16 = arith.constant 0 : index
    %c0_17 = arith.constant 0 : index
    %29 = vector.load %arg2[%c4, %c0_16, %c0_17] : memref<9x3x128xf32, #tpu.memory_space<vmem>>, vector<1x3x128xf32>
    %30 = vector.shape_cast %29 : vector<1x3x128xf32> to vector<3x128xf32>
    %cst_18 = arith.constant dense<0.000000e+00> : vector<256x128xf32>
    %31 = tpu.matmul %28, %30, %cst_18 {dimension_numbers = #tpu.dot_dimension_numbers<[1], [0], [0], [1], [0, 0, 1, 1], [], []>} : vector<256x3xf32>, vector<3x128xf32>, vector<256x128xf32> -> vector<256x128xf32>
    %32 = arith.addf %26, %31 : vector<256x128xf32>
    %33 = vector.extract_strided_slice %1 {offsets = [1, 2, 0], sizes = [16, 16, 3], strides = [1, 1, 1]} : vector<18x18x3xf32> to vector<16x16x3xf32>
    %34 = vector.shape_cast %33 : vector<16x16x3xf32> to vector<256x3xf32>
    %c5 = arith.constant 5 : index
    %c0_19 = arith.constant 0 : index
    %c0_20 = arith.constant 0 : index
    %35 = vector.load %arg2[%c5, %c0_19, %c0_20] : memref<9x3x128xf32, #tpu.memory_space<vmem>>, vector<1x3x128xf32>
    %36 = vector.shape_cast %35 : vector<1x3x128xf32> to vector<3x128xf32>
    %cst_21 = arith.constant dense<0.000000e+00> : vector<256x128xf32>
    %37 = tpu.matmul %34, %36, %cst_21 {dimension_numbers = #tpu.dot_dimension_numbers<[1], [0], [0], [1], [0, 0, 1, 1], [], []>} : vector<256x3xf32>, vector<3x128xf32>, vector<256x128xf32> -> vector<256x128xf32>
    %38 = arith.addf %32, %37 : vector<256x128xf32>
    %39 = vector.extract_strided_slice %1 {offsets = [2, 0, 0], sizes = [16, 16, 3], strides = [1, 1, 1]} : vector<18x18x3xf32> to vector<16x16x3xf32>
    %40 = vector.shape_cast %39 : vector<16x16x3xf32> to vector<256x3xf32>
    %c6 = arith.constant 6 : index
    %c0_22 = arith.constant 0 : index
    %c0_23 = arith.constant 0 : index
    %41 = vector.load %arg2[%c6, %c0_22, %c0_23] : memref<9x3x128xf32, #tpu.memory_space<vmem>>, vector<1x3x128xf32>
    %42 = vector.shape_cast %41 : vector<1x3x128xf32> to vector<3x128xf32>
    %cst_24 = arith.constant dense<0.000000e+00> : vector<256x128xf32>
    %43 = tpu.matmul %40, %42, %cst_24 {dimension_numbers = #tpu.dot_dimension_numbers<[1], [0], [0], [1], [0, 0, 1, 1], [], []>} : vector<256x3xf32>, vector<3x128xf32>, vector<256x128xf32> -> vector<256x128xf32>
    %44 = arith.addf %38, %43 : vector<256x128xf32>
    %45 = vector.extract_strided_slice %1 {offsets = [2, 1, 0], sizes = [16, 16, 3], strides = [1, 1, 1]} : vector<18x18x3xf32> to vector<16x16x3xf32>
    %46 = vector.shape_cast %45 : vector<16x16x3xf32> to vector<256x3xf32>
    %c7 = arith.constant 7 : index
    %c0_25 = arith.constant 0 : index
    %c0_26 = arith.constant 0 : index
    %47 = vector.load %arg2[%c7, %c0_25, %c0_26] : memref<9x3x128xf32, #tpu.memory_space<vmem>>, vector<1x3x128xf32>
    %48 = vector.shape_cast %47 : vector<1x3x128xf32> to vector<3x128xf32>
    %cst_27 = arith.constant dense<0.000000e+00> : vector<256x128xf32>
    %49 = tpu.matmul %46, %48, %cst_27 {dimension_numbers = #tpu.dot_dimension_numbers<[1], [0], [0], [1], [0, 0, 1, 1], [], []>} : vector<256x3xf32>, vector<3x128xf32>, vector<256x128xf32> -> vector<256x128xf32>
    %50 = arith.addf %44, %49 : vector<256x128xf32>
    %51 = vector.extract_strided_slice %1 {offsets = [2, 2, 0], sizes = [16, 16, 3], strides = [1, 1, 1]} : vector<18x18x3xf32> to vector<16x16x3xf32>
    %52 = vector.shape_cast %51 : vector<16x16x3xf32> to vector<256x3xf32>
    %c8 = arith.constant 8 : index
    %c0_28 = arith.constant 0 : index
    %c0_29 = arith.constant 0 : index
    %53 = vector.load %arg2[%c8, %c0_28, %c0_29] : memref<9x3x128xf32, #tpu.memory_space<vmem>>, vector<1x3x128xf32>
    %54 = vector.shape_cast %53 : vector<1x3x128xf32> to vector<3x128xf32>
    %cst_30 = arith.constant dense<0.000000e+00> : vector<256x128xf32>
    %55 = tpu.matmul %52, %54, %cst_30 {dimension_numbers = #tpu.dot_dimension_numbers<[1], [0], [0], [1], [0, 0, 1, 1], [], []>} : vector<256x3xf32>, vector<3x128xf32>, vector<256x128xf32> -> vector<256x128xf32>
    %56 = arith.addf %50, %55 : vector<256x128xf32>
    %c0_31 = arith.constant 0 : index
    %c0_32 = arith.constant 0 : index
    %57 = vector.load %arg3[%c0_31, %c0_32] : memref<1x128xf32, #tpu.memory_space<vmem>>, vector<1x128xf32>
    %58 = vector.broadcast %57 : vector<1x128xf32> to vector<256x128xf32>
    %59 = arith.addf %56, %58 : vector<256x128xf32>
    %cst_33 = arith.constant 0.000000e+00 : f32
    %60 = vector.broadcast %cst_33 : f32 to vector<256x128xf32>
    %61 = arith.maximumf %59, %60 : vector<256x128xf32>
    %cst_34 = arith.constant 3.906250e-03 : f32
    %62 = vector.broadcast %cst_34 : f32 to vector<1x256xf32>
    %cst_35 = arith.constant dense<0.000000e+00> : vector<1x128xf32>
    %63 = tpu.matmul %62, %61, %cst_35 {dimension_numbers = #tpu.dot_dimension_numbers<[1], [0], [0], [1], [0, 0, 1, 1], [], []>} : vector<1x256xf32>, vector<256x128xf32>, vector<1x128xf32> -> vector<1x128xf32>
    %c0_36 = arith.constant 0 : index
    %c0_37 = arith.constant 0 : index
    %64 = vector.load %arg4[%c0_36, %c0_37] : memref<128x128xf32, #tpu.memory_space<vmem>>, vector<128x128xf32>
    %cst_38 = arith.constant dense<0.000000e+00> : vector<1x128xf32>
    %65 = tpu.matmul %63, %64, %cst_38 {dimension_numbers = #tpu.dot_dimension_numbers<[1], [0], [0], [1], [0, 0, 1, 1], [], []>} : vector<1x128xf32>, vector<128x128xf32>, vector<1x128xf32> -> vector<1x128xf32>
    %c0_39 = arith.constant 0 : index
    %c0_40 = arith.constant 0 : index
    %66 = vector.load %arg5[%c0_39, %c0_40] : memref<1x128xf32, #tpu.memory_space<vmem>>, vector<1x128xf32>
    %67 = arith.addf %65, %66 : vector<1x128xf32>
    %cst_41 = arith.constant 0.000000e+00 : f32
    %68 = vector.broadcast %cst_41 : f32 to vector<1x128xf32>
    %69 = arith.maximumf %67, %68 : vector<1x128xf32>
    %c0_42 = arith.constant 0 : index
    %c0_43 = arith.constant 0 : index
    %c0_44 = arith.constant 0 : index
    %70 = vector.load %arg6[%c0_42, %c0_43, %c0_44] : memref<1x1x128xf32, #tpu.memory_space<vmem>>, vector<1x1x128xf32>
    %71 = vector.shape_cast %70 : vector<1x1x128xf32> to vector<1x128xf32>
    %72 = arith.mulf %69, %71 : vector<1x128xf32>
    %c0_45 = arith.constant 0 : index
    %c0_46 = arith.constant 0 : index
    %c0_47 = arith.constant 0 : index
    %73 = vector.load %arg7[%c0_45, %c0_46, %c0_47] : memref<1x1x128xf32, #tpu.memory_space<vmem>>, vector<1x1x128xf32>
    %74 = vector.shape_cast %73 : vector<1x1x128xf32> to vector<1x128xf32>
    %75 = vector.shape_cast %72 : vector<1x128xf32> to vector<1x1x128xf32>
    tpu.vector_store %arg7[%c0_45, %c0_46, %c0_47], %75 {strides = array<i32>} : memref<1x1x128xf32, #tpu.memory_space<vmem>>, vector<1x1x128xf32>,
    return
  }
  func.func @transform_0(%arg0: i32) -> (i32, i32, i32, i32) {
    %c0_i32 = arith.constant 0 : i32
    %c0_i32_0 = arith.constant 0 : i32
    %c0_i32_1 = arith.constant 0 : i32
    %c0_i32_2 = arith.constant 0 : i32
    return %arg0, %c0_i32, %c0_i32_0, %c0_i32_1 : i32, i32, i32, i32
  }
  func.func @transform_1(%arg0: i32) -> (i32, i32, i32) {
    %c0_i32 = arith.constant 0 : i32
    %c0_i32_0 = arith.constant 0 : i32
    %c0_i32_1 = arith.constant 0 : i32
    %c0_i32_2 = arith.constant 0 : i32
    return %c0_i32, %c0_i32_0, %c0_i32_1 : i32, i32, i32
  }
  func.func @transform_2(%arg0: i32) -> (i32, i32) {
    %c0_i32 = arith.constant 0 : i32
    %c0_i32_0 = arith.constant 0 : i32
    %c0_i32_1 = arith.constant 0 : i32
    return %c0_i32, %c0_i32_0 : i32, i32
  }
  func.func @transform_3(%arg0: i32) -> (i32, i32) {
    %c0_i32 = arith.constant 0 : i32
    %c0_i32_0 = arith.constant 0 : i32
    %c0_i32_1 = arith.constant 0 : i32
    return %c0_i32, %c0_i32_0 : i32, i32
  }
  func.func @transform_4(%arg0: i32) -> (i32, i32) {
    %c0_i32 = arith.constant 0 : i32
    %c0_i32_0 = arith.constant 0 : i32
    %c0_i32_1 = arith.constant 0 : i32
    return %c0_i32, %c0_i32_0 : i32, i32
  }
  func.func @transform_5(%arg0: i32) -> (i32, i32, i32) {
    %c0_i32 = arith.constant 0 : i32
    %c0_i32_0 = arith.constant 0 : i32
    %c0_i32_1 = arith.constant 0 : i32
    return %arg0, %c0_i32, %c0_i32_0 : i32, i32, i32
  }
  func.func @transform_6(%arg0: i32) -> (i32, i32, i32) {
    %c0_i32 = arith.constant 0 : i32
    %c0_i32_0 = arith.constant 0 : i32
    %c0_i32_1 = arith.constant 0 : i32
    return %arg0, %c0_i32, %c0_i32_0 : i32, i32, i32
  }
}

</mosaic_0001>

<llo_original>
// kernel: encoder_forward.1
$region0: #{encoder_forward.1}
  #allocation0 [shape = 'u32[]', space=smem, size = 0x4, offset = 0x4, fixed_abs, tag = 'smem constant byte address 0x4 - core index']
  #allocation1 [shape = 'u32[72,128]{1,0:T(1,128)}', space=vmem, size = 0x9000, scoped, tag = 'internal scratch']
  %s0 = inlined_call_operand.vmem [shape: f32[2,18,18,3], index: 0, kind: input, shape index: {}]
  %s1 = inlined_call_operand.vmem [shape: f32[9,3,128], index: 1, kind: input, shape index: {}]
  %s2 = inlined_call_operand.vmem [shape: f32[1,128], index: 2, kind: input, shape index: {}]
  %s3 = inlined_call_operand.vmem [shape: f32[128,128], index: 3, kind: input, shape index: {}]
  %s4 = inlined_call_operand.vmem [shape: f32[1,128], index: 4, kind: input, shape index: {}]
  %s5 = inlined_call_operand.vmem [shape: f32[2,1,128], index: 5, kind: input, shape index: {}]
  %s6 = inlined_call_operand.hbm [shape: f32[2,1,128], index: 6, kind: output, shape index: {}]
  %s7 = sld [smem:[#allocation0]]
  $region57: #{encoder_forward.1} parent=0
    _
  %s9 = ssub.s32 1, %s7
  %s10 = scalar_select 0, %s9, %s7
  $region1: #{encoder_forward.1} parent=0
    #allocation2 [shape = 'u8[1024]{0}', space=vmem, size = 0x400, scoped, tag = 'output window, operand 0']
    #allocation3 [shape = 's32[2]{0}', space=sflag, size = 0x8, scoped, tag = 'scoped memory for encoder_forward.1']
    %11 = vsyncpa [#allocation3], 0
    %s12 = scalar_lea.sflag [#allocation3], 1
    %13 = vsyncpa %s12, 0
    loop: start=0, step=1, limit=4
    $region2: #{encoder_forward.1} parent=1 // loop_pre_header
      _
    $region3: #{encoder_forward.1} parent=1 // loop_header
      %s15 = sphi 0, %s19
      %p16 = scmp.ge.s32.totalorder %s15, 4
      %s25 = sphi 0, %s27
      %s28 = sphi 0, %s25
      %s29 = sphi 0, %s28
      %s45 = sphi 0, %s29
      %s49 = sphi 0, %s49
      %s51 = sphi 0, %s49
      %s52 = sphi 0, %s51
      %s66 = sphi 0, %s52
      %s70 = sphi 0, %s70
      %s72 = sphi 0, %s70
      %s73 = sphi 0, %s72
      %s87 = sphi 0, %s73
      %s91 = sphi 0, %s91
      %s93 = sphi 0, %s91
      %s94 = sphi 0, %s93
      %s108 = sphi 0, %s94
      %s112 = sphi 0, %s112
      %s114 = sphi 0, %s112
      %s115 = sphi 0, %s114
      %s129 = sphi 0, %s115
      %s135 = sphi 0, %s137
      %s138 = sphi 0, %s135
      %s139 = sphi 0, %s138
      %s155 = sphi 0, %s139
      %s161 = sphi 0, %s163
      %s164 = sphi 0, %s161
      %s165 = sphi 0, %s164
      %s181 = sphi 0, %s165
    $region4: #{encoder_forward.1} parent=1 // loop_header_branch
      %18 = sbr.rel (%p16) target = $region8
    $region5: #{encoder_forward.1} parent=1 // loop_body
      %s20 = ssub.s32 %s15, 1
      %s21 = ssub.s32 %s15, 2
      %s22 = sadd.s32 %s15, 1
      %s23 = ssub.s32 %s15, %s22
      %p24 = scmp.eq.s32.totalorder %s23, 0
      %s26 = sadd.s32 %s25, 1
      %s27 = scalar_select %p24, %s25, %s26
      %p30 = pneg %p24
      %p31 = scmp.eq.s32.totalorder %s15, 1
      %p32 = por %p30, %p31
      %p33 = scmp.ne.s32.totalorder %s25, %s28
      %p34 = scmp.eq.s32.totalorder %s15, 0
      %p35 = por %p33, %p34
      %p36 = scmp.ne.s32.totalorder %s25, %s28
      %p37 = scmp.eq.s32.totalorder %s20, 1
      %p38 = por %p36, %p37
      %p39 = scmp.ne.s32.totalorder %s28, %s29
      %p40 = scmp.eq.s32.totalorder %s20, 0
      %p41 = por %p39, %p40
      %p42 = scmp.ne.s32.totalorder %s28, %s29
      %p43 = scmp.eq.s32.totalorder %s21, 1
      %p44 = por %p42, %p43
      %p46 = scmp.ne.s32.totalorder %s29, %s45
      %p47 = scmp.eq.s32.totalorder %s21, 0
      %p48 = por %p46, %p47
      %s50 = sadd.s32 %s49, 1
      %p53 = scmp.eq.s32.totalorder %s15, 1
      %p54 = scmp.ne.s32.totalorder %s49, %s51
      %p55 = scmp.eq.s32.totalorder %s15, 0
      %p56 = por %p54, %p55
      %p57 = scmp.ne.s32.totalorder %s49, %s51
      %p58 = scmp.eq.s32.totalorder %s20, 1
      %p59 = por %p57, %p58
      %p60 = scmp.ne.s32.totalorder %s51, %s52
      %p61 = scmp.eq.s32.totalorder %s20, 0
      %p62 = por %p60, %p61
      %p63 = scmp.ne.s32.totalorder %s51, %s52
      %p64 = scmp.eq.s32.totalorder %s21, 1
      %p65 = por %p63, %p64
      %p67 = scmp.ne.s32.totalorder %s52, %s66
      %p68 = scmp.eq.s32.totalorder %s21, 0
      %p69 = por %p67, %p68
      %s71 = sadd.s32 %s70, 1
      %p74 = scmp.eq.s32.totalorder %s15, 1
      %p75 = scmp.ne.s32.totalorder %s70, %s72
      %p76 = scmp.eq.s32.totalorder %s15, 0
      %p77 = por %p75, %p76
      %p78 = scmp.ne.s32.totalorder %s70, %s72
      %p79 = scmp.eq.s32.totalorder %s20, 1
      %p80 = por %p78, %p79
      %p81 = scmp.ne.s32.totalorder %s72, %s73
      %p82 = scmp.eq.s32.totalorder %s20, 0
      %p83 = por %p81, %p82
      %p84 = scmp.ne.s32.totalorder %s72, %s73
      %p85 = scmp.eq.s32.totalorder %s21, 1
      %p86 = por %p84, %p85
      %p88 = scmp.ne.s32.totalorder %s73, %s87
      %p89 = scmp.eq.s32.totalorder %s21, 0
      %p90 = por %p88, %p89
      %s92 = sadd.s32 %s91, 1
      %p95 = scmp.eq.s32.totalorder %s15, 1
      %p96 = scmp.ne.s32.totalorder %s91, %s93
      %p97 = scmp.eq.s32.totalorder %s15, 0
      %p98 = por %p96, %p97
      %p99 = scmp.ne.s32.totalorder %s91, %s93
      %p100 = scmp.eq.s32.totalorder %s20, 1
      %p101 = por %p99, %p100
      %p102 = scmp.ne.s32.totalorder %s93, %s94
      %p103 = scmp.eq.s32.totalorder %s20, 0
      %p104 = por %p102, %p103
      %p105 = scmp.ne.s32.totalorder %s93, %s94
      %p106 = scmp.eq.s32.totalorder %s21, 1
      %p107 = por %p105, %p106
      %p109 = scmp.ne.s32.totalorder %s94, %s108
      %p110 = scmp.eq.s32.totalorder %s21, 0
      %p111 = por %p109, %p110
      %s113 = sadd.s32 %s112, 1
      %p116 = scmp.eq.s32.totalorder %s15, 1
      %p117 = scmp.ne.s32.totalorder %s112, %s114
      %p118 = scmp.eq.s32.totalorder %s15, 0
      %p119 = por %p117, %p118
      %p120 = scmp.ne.s32.totalorder %s112, %s114
      %p121 = scmp.eq.s32.totalorder %s20, 1
      %p122 = por %p120, %p121
      %p123 = scmp.ne.s32.totalorder %s114, %s115
      %p124 = scmp.eq.s32.totalorder %s20, 0
      %p125 = por %p123, %p124
      %p126 = scmp.ne.s32.totalorder %s114, %s115
      %p127 = scmp.eq.s32.totalorder %s21, 1
      %p128 = por %p126, %p127
      %p130 = scmp.ne.s32.totalorder %s115, %s129
      %p131 = scmp.eq.s32.totalorder %s21, 0
      %p132 = por %p130, %p131
      %s133 = ssub.s32 %s15, %s22
      %p134 = scmp.eq.s32.totalorder %s133, 0
      %s136 = sadd.s32 %s135, 1
      %s137 = scalar_select %p134, %s135, %s136
      %p140 = pneg %p134
      %p141 = scmp.eq.s32.totalorder %s15, 1
      %p142 = por %p140, %p141
      %p143 = scmp.ne.s32.totalorder %s135, %s138
      %p144 = scmp.eq.s32.totalorder %s15, 0
      %p145 = por %p143, %p144
      %p146 = scmp.ne.s32.totalorder %s135, %s138
      %p147 = scmp.eq.s32.totalorder %s20, 1
      %p148 = por %p146, %p147
      %p149 = scmp.ne.s32.totalorder %s138, %s139
      %p150 = scmp.eq.s32.totalorder %s20, 0
      %p151 = por %p149, %p150
      %p152 = scmp.ne.s32.totalorder %s138, %s139
      %p153 = scmp.eq.s32.totalorder %s21, 1
      %p154 = por %p152, %p153
      %p156 = scmp.ne.s32.totalorder %s139, %s155
      %p157 = scmp.eq.s32.totalorder %s21, 0
      %p158 = por %p156, %p157
      %s159 = ssub.s32 %s15, %s22
      %p160 = scmp.eq.s32.totalorder %s159, 0
      %s162 = sadd.s32 %s161, 1
      %s163 = scalar_select %p160, %s161, %s162
      %p166 = pneg %p160
      %p167 = scmp.eq.s32.totalorder %s15, 1
      %p168 = por %p166, %p167
      %p169 = scmp.ne.s32.totalorder %s161, %s164
      %p170 = scmp.eq.s32.totalorder %s15, 0
      %p171 = por %p169, %p170
      %p172 = scmp.ne.s32.totalorder %s161, %s164
      %p173 = scmp.eq.s32.totalorder %s20, 1
      %p174 = por %p172, %p173
      %p175 = scmp.ne.s32.totalorder %s164, %s165
      %p176 = scmp.eq.s32.totalorder %s20, 0
      %p177 = por %p175, %p176
      %p178 = scmp.ne.s32.totalorder %s164, %s165
      %p179 = scmp.eq.s32.totalorder %s21, 1
      %p180 = por %p178, %p179
      %p182 = scmp.ne.s32.totalorder %s165, %s181
      %p183 = scmp.eq.s32.totalorder %s21, 0
      %p184 = por %p182, %p183
      %p185 = scmp.le.s32.totalorder 1, %s15
      %p186 = scmp.lt.s32.totalorder %s15, 3
      %p187 = pnand %p185, %p186
      %p188 = pneg %p187
      // Predicated region
      $region9: #{encoder_forward.1} parent=5 // pred_check
        _
      $region10: #{encoder_forward.1} parent=5 // pred_check_branch
        %190 = sbr.rel (%p187) target = $region12
      $region11: #{encoder_forward.1} parent=5 // pred_region
        %s191 = ssub.s32 %s15, 1
        // Predicated region
        $region13: #{encoder_forward.1} parent=11 // pred_check
          %p192 = pneg %p62
        $region14: #{encoder_forward.1} parent=11 // pred_check_branch
          %194 = sbr.rel (%p192) target = $region16
        $region15: #{encoder_forward.1} parent=11 // pred_region
          _
        $region16: #{encoder_forward.1} parent=11 // pred_fallthru
          _
        // Predicated region
        $region17: #{encoder_forward.1} parent=11 // pred_check
          %p195 = pneg %p83
        $region18: #{encoder_forward.1} parent=11 // pred_check_branch
          %197 = sbr.rel (%p195) target = $region20
        $region19: #{encoder_forward.1} parent=11 // pred_region
          _
        $region20: #{encoder_forward.1} parent=11 // pred_fallthru
          _
        // Predicated region
        $region21: #{encoder_forward.1} parent=11 // pred_check
          %p198 = pneg %p104
        $region22: #{encoder_forward.1} parent=11 // pred_check_branch
          %200 = sbr.rel (%p198) target = $region24
        $region23: #{encoder_forward.1} parent=11 // pred_region
          _
        $region24: #{encoder_forward.1} parent=11 // pred_fallthru
          _
        // Predicated region
        $region25: #{encoder_forward.1} parent=11 // pred_check
          %p201 = pneg %p125
        $region26: #{encoder_forward.1} parent=11 // pred_check_branch
          %203 = sbr.rel (%p201) target = $region28
        $region27: #{encoder_forward.1} parent=11 // pred_region
          _
        $region28: #{encoder_forward.1} parent=11 // pred_fallthru
          _
      $region12: #{encoder_forward.1} parent=5 // pred_fallthru
        _
      %p204 = scmp.lt.s32.totalorder %s15, 2
      // Predicated region
      $region29: #{encoder_forward.1} parent=5 // pred_check
        %p205 = pneg %p204
      $region30: #{encoder_forward.1} parent=5 // pred_check_branch
        %207 = sbr.rel (%p205) target = $region32
      $region31: #{encoder_forward.1} parent=5 // pred_region
        // Predicated region
        $region33: #{encoder_forward.1} parent=31 // pred_check
          %p208 = pneg %p35
        $region34: #{encoder_forward.1} parent=31 // pred_check_branch
          %210 = sbr.rel (%p208) target = $region36
        $region35: #{encoder_forward.1} parent=31 // pred_region
          %p211 = scmp.lt.s32.totalorder %s15, 1
          %s212 = scalar_select %p211, %s15, 1
          %s213 = smul.addr %s212, 54
          %s214 = smul.addr %s213, 8
          %s215 = scalar_lea.vmem %s0, %s214
        $region36: #{encoder_forward.1} parent=31 // pred_fallthru
          _
        // Predicated region
        $region37: #{encoder_forward.1} parent=31 // pred_check
          %p216 = pneg %p145
        $region38: #{encoder_forward.1} parent=31 // pred_check_branch
          %218 = sbr.rel (%p216) target = $region40
        $region39: #{encoder_forward.1} parent=31 // pred_region
          %p219 = scmp.lt.s32.totalorder %s15, 1
          %s220 = scalar_select %p219, %s15, 1
          %s221 = scalar_lea.vmem %s5, %s220
        $region40: #{encoder_forward.1} parent=31 // pred_fallthru
          _
      $region32: #{encoder_forward.1} parent=5 // pred_fallthru
        _
      %p222 = scmp.le.s32.totalorder 1, %s15
      %p223 = scmp.lt.s32.totalorder %s15, 3
      %p224 = pnand %p222, %p223
      %p225 = pneg %p224
      // Predicated region
      $region41: #{encoder_forward.1} parent=5 // pred_check
        _
      $region42: #{encoder_forward.1} parent=5 // pred_check_branch
        %227 = sbr.rel (%p224) target = $region44
      $region43: #{encoder_forward.1} parent=5 // pred_region
        %s228 = ssub.s32 %s15, 1
        %p229 = scmp.lt.s32.totalorder %s20, 1
        %s230 = scalar_select %p229, %s20, 1
        %s231 = smul.addr %s230, 54
        %s232 = smul.addr %s231, 8
        %s233 = scalar_lea.vmem %s0, %s232
        %p234 = pneg %p41
        %p235 = pneg %p38
        %p236 = pneg %p62
        %p237 = pneg %p59
        %p238 = pneg %p83
        %p239 = pneg %p80
        %p240 = pneg %p104
        %p241 = pneg %p101
        %p242 = pneg %p125
        %p243 = pneg %p122
        %p244 = scmp.lt.s32.totalorder %s20, 1
        %s245 = scalar_select %p244, %s20, 1
        %s246 = scalar_lea.vmem %s5, %s245
        %p247 = pneg %p151
        %p248 = pneg %p148
        %p249 = pneg %p177
        %p250 = pneg %p174
        %s251 = sand.u32 %s164, 1
        %s252 = scalar_lea.sflag [#allocation3], %s251
        %s253 = sand.u32 %s164, 1
        %s254 = scalar_lea.vmem [#allocation2], %s253
        %p255 = scmp.lt.s32.totalorder %s20, 1
        %s256 = scalar_select %p255, %s20, 1
        %s257 = smul.addr %s256, 54
        %s258 = smul.addr %s257, 8
        %s259 = scalar_lea.vmem %s0, %s258
        %p260 = scmp.lt.s32.totalorder %s20, 1
        %s261 = scalar_select %p260, %s20, 1
        %s262 = scalar_lea.vmem %s5, %s261
        %v263 = vld [vmem:[%s259] sm:$0xff]
        %v264 = vld [vmem:[%s259 + $0x8] sm:$0xff]
        %v265 = vld [vmem:[%s259 + $0x10] sm:$0x3]
        %v266 = vld [vmem:[%s259 + $0x18] sm:$0xff]
        %v267 = vld [vmem:[%s259 + $0x20] sm:$0xff]
        %v268 = vld [vmem:[%s259 + $0x28] sm:$0x3]
        %v269 = vld [vmem:[%s259 + $0x30] sm:$0xff]
        %v270 = vld [vmem:[%s259 + $0x38] sm:$0xff]
        %v271 = vld [vmem:[%s259 + $0x40] sm:$0x3]
        %v272 = vld [vmem:[%s259 + $0x48] sm:$0xff]
        %v273 = vld [vmem:[%s259 + $0x50] sm:$0xff]
        %v274 = vld [vmem:[%s259 + $0x58] sm:$0x3]
        %v275 = vld [vmem:[%s259 + $0x60] sm:$0xff]
        %v276 = vld [vmem:[%s259 + $0x68] sm:$0xff]
        %v277 = vld [vmem:[%s259 + $0x70] sm:$0x3]
        %v278 = vld [vmem:[%s259 + $0x78] sm:$0xff]
        %v279 = vld [vmem:[%s259 + $0x80] sm:$0xff]
        %v280 = vld [vmem:[%s259 + $0x88] sm:$0x3]
        %v281 = vld [vmem:[%s259 + $0x90] sm:$0xff]
        %v282 = vld [vmem:[%s259 + $0x98] sm:$0xff]
        %v283 = vld [vmem:[%s259 + $0xa0] sm:$0x3]
        %v284 = vld [vmem:[%s259 + $0xa8] sm:$0xff]
        %v285 = vld [vmem:[%s259 + $0xb0] sm:$0xff]
        %v286 = vld [vmem:[%s259 + $0xb8] sm:$0x3]
        %v287 = vld [vmem:[%s259 + $0xc0] sm:$0xff]
        %v288 = vld [vmem:[%s259 + $0xc8] sm:$0xff]
        %v289 = vld [vmem:[%s259 + $0xd0] sm:$0x3]
        %v290 = vld [vmem:[%s259 + $0xd8] sm:$0xff]
        %v291 = vld [vmem:[%s259 + $0xe0] sm:$0xff]
        %v292 = vld [vmem:[%s259 + $0xe8] sm:$0x3]
        %v293 = vld [vmem:[%s259 + $0xf0] sm:$0xff]
        %v294 = vld [vmem:[%s259 + $0xf8] sm:$0xff]
        %v295 = vld [vmem:[%s259 + $0x100] sm:$0x3]
        %v296 = vld [vmem:[%s259 + $0x108] sm:$0xff]
        %v297 = vld [vmem:[%s259 + $0x110] sm:$0xff]
        %v298 = vld [vmem:[%s259 + $0x118] sm:$0x3]
        %v299 = vld [vmem:[%s259 + $0x120] sm:$0xff]
        %v300 = vld [vmem:[%s259 + $0x128] sm:$0xff]
        %v301 = vld [vmem:[%s259 + $0x130] sm:$0x3]
        %v302 = vld [vmem:[%s259 + $0x138] sm:$0xff]
        %v303 = vld [vmem:[%s259 + $0x140] sm:$0xff]
        %v304 = vld [vmem:[%s259 + $0x148] sm:$0x3]
        %v305 = vld [vmem:[%s259 + $0x150] sm:$0xff]
        %v306 = vld [vmem:[%s259 + $0x158] sm:$0xff]
        %v307 = vld [vmem:[%s259 + $0x160] sm:$0x3]
        %v308 = vld [vmem:[%s259 + $0x168] sm:$0xff]
        %v309 = vld [vmem:[%s259 + $0x170] sm:$0xff]
        %v310 = vld [vmem:[%s259 + $0x178] sm:$0x3]
        %v311 = vld [vmem:[%s259 + $0x180] sm:$0xff]
        %v312 = vld [vmem:[%s259 + $0x188] sm:$0xff]
        %v313 = vld [vmem:[%s259 + $0x190] sm:$0x3]
        %v314 = vld [vmem:[%s259 + $0x198] sm:$0xff]
        %v315 = vld [vmem:[%s259 + $0x1a0] sm:$0xff]
        %v316 = vld [vmem:[%s259 + $0x1a8] sm:$0x3]
        %v317 = vld [vmem:[%s1] sm:$0x7]
        %vm366 = vcmask 1046528
        %v367 = vrot.slane %v263, 1
        %v368 = vrot.slane %v264, 1
        %v369 = vsel %vm366, %v367, %v368
        %v370 = vrot.slane %v265, 1
        %v371 = vsel %vm366, %v368, %v370
        %v372 = vrot.slane %v266, 1
        %v373 = vrot.slane %v267, 1
        %v374 = vsel %vm366, %v372, %v373
        %v375 = vrot.slane %v268, 1
        %v376 = vsel %vm366, %v373, %v375
        %v377 = vrot.slane %v269, 1
        %v378 = vrot.slane %v270, 1
        %v379 = vsel %vm366, %v377, %v378
        %v380 = vrot.slane %v271, 1
        %v381 = vsel %vm366, %v378, %v380
        %v382 = vrot.slane %v272, 1
        %v383 = vrot.slane %v273, 1
        %v384 = vsel %vm366, %v382, %v383
        %v385 = vrot.slane %v274, 1
        %v386 = vsel %vm366, %v383, %v385
        %v387 = vrot.slane %v275, 1
        %v388 = vrot.slane %v276, 1
        %v389 = vsel %vm366, %v387, %v388
        %v390 = vrot.slane %v277, 1
        %v391 = vsel %vm366, %v388, %v390
        %v392 = vrot.slane %v278, 1
        %v393 = vrot.slane %v279, 1
        %v394 = vsel %vm366, %v392, %v393
        %v395 = vrot.slane %v280, 1
        %v396 = vsel %vm366, %v393, %v395
        %v397 = vrot.slane %v281, 1
        %v398 = vrot.slane %v282, 1
        %v399 = vsel %vm366, %v397, %v398
        %v400 = vrot.slane %v283, 1
        %v401 = vsel %vm366, %v398, %v400
        %v402 = vrot.slane %v284, 1
        %v403 = vrot.slane %v285, 1
        %v404 = vsel %vm366, %v402, %v403
        %v405 = vrot.slane %v286, 1
        %v406 = vsel %vm366, %v403, %v405
        %v407 = vrot.slane %v287, 1
        %v408 = vrot.slane %v288, 1
        %v409 = vsel %vm366, %v407, %v408
        %v410 = vrot.slane %v289, 1
        %v411 = vsel %vm366, %v408, %v410
        %v412 = vrot.slane %v290, 1
        %v413 = vrot.slane %v291, 1
        %v414 = vsel %vm366, %v412, %v413
        %v415 = vrot.slane %v292, 1
        %v416 = vsel %vm366, %v413, %v415
        %v417 = vrot.slane %v293, 1
        %v418 = vrot.slane %v294, 1
        %v419 = vsel %vm366, %v417, %v418
        %v420 = vrot.slane %v295, 1
        %v421 = vsel %vm366, %v418, %v420
        %v422 = vrot.slane %v296, 1
        %v423 = vrot.slane %v297, 1
        %v424 = vsel %vm366, %v422, %v423
        %v425 = vrot.slane %v298, 1
        %v426 = vsel %vm366, %v423, %v425
        %v427 = vrot.slane %v299, 1
        %v428 = vrot.slane %v300, 1
        %v429 = vsel %vm366, %v427, %v428
        %v430 = vrot.slane %v301, 1
        %v431 = vsel %vm366, %v428, %v430
        %v432 = vrot.slane %v302, 1
        %v433 = vrot.slane %v303, 1
        %v434 = vsel %vm366, %v432, %v433
        %v435 = vrot.slane %v304, 1
        %v436 = vsel %vm366, %v433, %v435
        %v437 = vrot.slane %v305, 1
        %v438 = vrot.slane %v306, 1
        %v439 = vsel %vm366, %v437, %v438
        %v440 = vrot.slane %v307, 1
        %v441 = vsel %vm366, %v438, %v440
        %v442 = vrot.slane %v308, 1
        %v443 = vrot.slane %v309, 1
        %v444 = vsel %vm366, %v442, %v443
        %v445 = vrot.slane %v310, 1
        %v446 = vsel %vm366, %v443, %v445
        %s447 = scalar_lea.vmem %s1, 4
        %v448 = vld [vmem:[%s447] sm:$0x7]
        %vm449 = vcmask 23552
        %v450 = vsel %vm449, %v369, 0
        %v452 = vsel %vm449, %v371, 0
        %v454 = vsel %vm449, %v374, 0
        %v456 = vsel %vm449, %v376, 0
        %v458 = vsel %vm449, %v379, 0
        %v460 = vsel %vm449, %v381, 0
        %v462 = vsel %vm449, %v384, 0
        %v464 = vsel %vm449, %v386, 0
        %v466 = vsel %vm449, %v389, 0
        %v468 = vsel %vm449, %v391, 0
        %v470 = vsel %vm449, %v394, 0
        %v472 = vsel %vm449, %v396, 0
        %v474 = vsel %vm449, %v399, 0
        %v476 = vsel %vm449, %v401, 0
        %v478 = vsel %vm449, %v404, 0
        %v480 = vsel %vm449, %v406, 0
        %v482 = vsel %vm449, %v409, 0
        %v484 = vsel %vm449, %v411, 0
        %v486 = vsel %vm449, %v414, 0
        %v488 = vsel %vm449, %v416, 0
        %v490 = vsel %vm449, %v419, 0
        %v492 = vsel %vm449, %v421, 0
        %v494 = vsel %vm449, %v424, 0
        %v496 = vsel %vm449, %v426, 0
        %v498 = vsel %vm449, %v429, 0
        %v500 = vsel %vm449, %v431, 0
        %v502 = vsel %vm449, %v434, 0
        %v504 = vsel %vm449, %v436, 0
        %v506 = vsel %vm449, %v439, 0
        %v508 = vsel %vm449, %v441, 0
        %v510 = vsel %vm449, %v444, 0
        %v512 = vsel %vm449, %v446, 0
        %vm514 = vcmask 1042432
        %v516 = vsel %vm514, %v448, 0
        %518 = vmatpush.msra.mxu0 0.0
        %519 = vmatpush.msra.mxu0 0.0
        %520 = vmatpush.msra.mxu0 0.0
        %521 = vmatpush.msra.mxu0 0.0
        %522 = vmatpush.msra.mxu0 0.0
        %523 = vmatpush.msra.mxu0 0.0
        %524 = vmatpush.msra.mxu0 0.0
        %525 = vmatpush.msra.mxu0 0.0
        %526 = vmatpush.msra.mxu0 0.0
        %527 = vmatpush.msra.mxu0 0.0
        %528 = vmatpush.msra.mxu0 0.0
        %529 = vmatpush.msra.mxu0 0.0
        %530 = vmatpush.msra.mxu0 0.0
        %531 = vmatpush.msra.mxu0 0.0
        %532 = vmatpush.msra.mxu0 0.0
        %533 = vmatpush.msra.mxu0 %v516
        %534 = vmatmul.f32.gmra.mxu0 %v450
        %v535 = vpop.f32.mrf.mxu0
        %v536 = vadd.f32 0.0, %v535
        %537 = vmatmul.f32.gmra.mxu0 %v452
        %v538 = vpop.f32.mrf.mxu0
        %v539 = vadd.f32 0.0, %v538
        %540 = vmatmul.f32.gmra.mxu0 %v454
        %v541 = vpop.f32.mrf.mxu0
        %v542 = vadd.f32 0.0, %v541
        %543 = vmatmul.f32.gmra.mxu0 %v456
        %v544 = vpop.f32.mrf.mxu0
        %v545 = vadd.f32 0.0, %v544
        %546 = vmatmul.f32.gmra.mxu0 %v458
        %v547 = vpop.f32.mrf.mxu0
        %v548 = vadd.f32 0.0, %v547
        %549 = vmatmul.f32.gmra.mxu0 %v460
        %v550 = vpop.f32.mrf.mxu0
        %v551 = vadd.f32 0.0, %v550
        %552 = vmatmul.f32.gmra.mxu0 %v462
        %v553 = vpop.f32.mrf.mxu0
        %v554 = vadd.f32 0.0, %v553
        %555 = vmatmul.f32.gmra.mxu0 %v464
        %v556 = vpop.f32.mrf.mxu0
        %v557 = vadd.f32 0.0, %v556
        %558 = vmatmul.f32.gmra.mxu0 %v466
        %v559 = vpop.f32.mrf.mxu0
        %v560 = vadd.f32 0.0, %v559
        %561 = vmatmul.f32.gmra.mxu0 %v468
        %v562 = vpop.f32.mrf.mxu0
        %v563 = vadd.f32 0.0, %v562
        %564 = vmatmul.f32.gmra.mxu0 %v470
        %v565 = vpop.f32.mrf.mxu0
        %v566 = vadd.f32 0.0, %v565
        %567 = vmatmul.f32.gmra.mxu0 %v472
        %v568 = vpop.f32.mrf.mxu0
        %v569 = vadd.f32 0.0, %v568
        %570 = vmatmul.f32.gmra.mxu0 %v474
        %v571 = vpop.f32.mrf.mxu0
        %v572 = vadd.f32 0.0, %v571
        %573 = vmatmul.f32.gmra.mxu0 %v476
        %v574 = vpop.f32.mrf.mxu0
        %v575 = vadd.f32 0.0, %v574
        %576 = vmatmul.f32.gmra.mxu0 %v478
        %v577 = vpop.f32.mrf.mxu0
        %v578 = vadd.f32 0.0, %v577
        %579 = vmatmul.f32.gmra.mxu0 %v480
        %v580 = vpop.f32.mrf.mxu0
        %v581 = vadd.f32 0.0, %v580
        %582 = vmatmul.f32.gmra.mxu0 %v482
        %v583 = vpop.f32.mrf.mxu0
        %v584 = vadd.f32 0.0, %v583
        %585 = vmatmul.f32.gmra.mxu0 %v484
        %v586 = vpop.f32.mrf.mxu0
        %v587 = vadd.f32 0.0, %v586
        %588 = vmatmul.f32.gmra.mxu0 %v486
        %v589 = vpop.f32.mrf.mxu0
        %v590 = vadd.f32 0.0, %v589
        %591 = vmatmul.f32.gmra.mxu0 %v488
        %v592 = vpop.f32.mrf.mxu0
        %v593 = vadd.f32 0.0, %v592
        %594 = vmatmul.f32.gmra.mxu0 %v490
        %v595 = vpop.f32.mrf.mxu0
        %v596 = vadd.f32 0.0, %v595
        %597 = vmatmul.f32.gmra.mxu0 %v492
        %v598 = vpop.f32.mrf.mxu0
        %v599 = vadd.f32 0.0, %v598
        %600 = vmatmul.f32.gmra.mxu0 %v494
        %v601 = vpop.f32.mrf.mxu0
        %v602 = vadd.f32 0.0, %v601
        %603 = vmatmul.f32.gmra.mxu0 %v496
        %v604 = vpop.f32.mrf.mxu0
        %v605 = vadd.f32 0.0, %v604
        %606 = vmatmul.f32.gmra.mxu0 %v498
        %v607 = vpop.f32.mrf.mxu0
        %v608 = vadd.f32 0.0, %v607
        %609 = vmatmul.f32.gmra.mxu0 %v500
        %v610 = vpop.f32.mrf.mxu0
        %v611 = vadd.f32 0.0, %v610
        %612 = vmatmul.f32.gmra.mxu0 %v502
        %v613 = vpop.f32.mrf.mxu0
        %v614 = vadd.f32 0.0, %v613
        %615 = vmatmul.f32.gmra.mxu0 %v504
        %v616 = vpop.f32.mrf.mxu0
        %v617 = vadd.f32 0.0, %v616
        %618 = vmatmul.f32.gmra.mxu0 %v506
        %v619 = vpop.f32.mrf.mxu0
        %v620 = vadd.f32 0.0, %v619
        %621 = vmatmul.f32.gmra.mxu0 %v508
        %v622 = vpop.f32.mrf.mxu0
        %v623 = vadd.f32 0.0, %v622
        %624 = vmatmul.f32.gmra.mxu0 %v510
        %v625 = vpop.f32.mrf.mxu0
        %v626 = vadd.f32 0.0, %v625
        %627 = vmatmul.f32.gmra.mxu0 %v512
        %v628 = vpop.f32.mrf.mxu0
        %v629 = vadd.f32 0.0, %v628
        %630 = vdwg.mxu0
        %v631 = vsel %vm449, %v263, 0
        %v633 = vsel %vm449, %v264, 0
        %v635 = vsel %vm449, %v266, 0
        %v637 = vsel %vm449, %v267, 0
        %v639 = vsel %vm449, %v269, 0
        %v641 = vsel %vm449, %v270, 0
        %v643 = vsel %vm449, %v272, 0
        %v645 = vsel %vm449, %v273, 0
        %v647 = vsel %vm449, %v275, 0
        %v649 = vsel %vm449, %v276, 0
        %v651 = vsel %vm449, %v278, 0
        %v653 = vsel %vm449, %v279, 0
        %v655 = vsel %vm449, %v281, 0
        %v657 = vsel %vm449, %v282, 0
        %v659 = vsel %vm449, %v284, 0
        %v661 = vsel %vm449, %v285, 0
        %v663 = vsel %vm449, %v287, 0
        %v665 = vsel %vm449, %v288, 0
        %v667 = vsel %vm449, %v290, 0
        %v669 = vsel %vm449, %v291, 0
        %v671 = vsel %vm449, %v293, 0
        %v673 = vsel %vm449, %v294, 0
        %v675 = vsel %vm449, %v296, 0
        %v677 = vsel %vm449, %v297, 0
        %v679 = vsel %vm449, %v299, 0
        %v681 = vsel %vm449, %v300, 0
        %v683 = vsel %vm449, %v302, 0
        %v685 = vsel %vm449, %v303, 0
        %v687 = vsel %vm449, %v305, 0
        %v689 = vsel %vm449, %v306, 0
        %v691 = vsel %vm449, %v308, 0
        %v693 = vsel %vm449, %v309, 0
        %v696 = vsel %vm514, %v317, 0
        %698 = vmatpush.msra.mxu0 0.0
        %699 = vmatpush.msra.mxu0 0.0
        %700 = vmatpush.msra.mxu0 0.0
        %701 = vmatpush.msra.mxu0 0.0
        %702 = vmatpush.msra.mxu0 0.0
        %703 = vmatpush.msra.mxu0 0.0
        %704 = vmatpush.msra.mxu0 0.0
        %705 = vmatpush.msra.mxu0 0.0
        %706 = vmatpush.msra.mxu0 0.0
        %707 = vmatpush.msra.mxu0 0.0
        %708 = vmatpush.msra.mxu0 0.0
        %709 = vmatpush.msra.mxu0 0.0
        %710 = vmatpush.msra.mxu0 0.0
        %711 = vmatpush.msra.mxu0 0.0
        %712 = vmatpush.msra.mxu0 0.0
        %713 = vmatpush.msra.mxu0 %v696
        %714 = vmatmul.f32.gmra.mxu0 %v631
        %v715 = vpop.f32.mrf.mxu0
        %v716 = vadd.f32 %v536, %v715
        %717 = vmatmul.f32.gmra.mxu0 %v633
        %v718 = vpop.f32.mrf.mxu0
        %v719 = vadd.f32 %v539, %v718
        %720 = vmatmul.f32.gmra.mxu0 %v635
        %v721 = vpop.f32.mrf.mxu0
        %v722 = vadd.f32 %v542, %v721
        %723 = vmatmul.f32.gmra.mxu0 %v637
        %v724 = vpop.f32.mrf.mxu0
        %v725 = vadd.f32 %v545, %v724
        %726 = vmatmul.f32.gmra.mxu0 %v639
        %v727 = vpop.f32.mrf.mxu0
        %v728 = vadd.f32 %v548, %v727
        %729 = vmatmul.f32.gmra.mxu0 %v641
        %v730 = vpop.f32.mrf.mxu0
        %v731 = vadd.f32 %v551, %v730
        %732 = vmatmul.f32.gmra.mxu0 %v643
        %v733 = vpop.f32.mrf.mxu0
        %v734 = vadd.f32 %v554, %v733
        %735 = vmatmul.f32.gmra.mxu0 %v645
        %v736 = vpop.f32.mrf.mxu0
        %v737 = vadd.f32 %v557, %v736
        %738 = vmatmul.f32.gmra.mxu0 %v647
        %v739 = vpop.f32.mrf.mxu0
        %v740 = vadd.f32 %v560, %v739
        %741 = vmatmul.f32.gmra.mxu0 %v649
        %v742 = vpop.f32.mrf.mxu0
        %v743 = vadd.f32 %v563, %v742
        %744 = vmatmul.f32.gmra.mxu0 %v651
        %v745 = vpop.f32.mrf.mxu0
        %v746 = vadd.f32 %v566, %v745
        %747 = vmatmul.f32.gmra.mxu0 %v653
        %v748 = vpop.f32.mrf.mxu0
        %v749 = vadd.f32 %v569, %v748
        %750 = vmatmul.f32.gmra.mxu0 %v655
        %v751 = vpop.f32.mrf.mxu0
        %v752 = vadd.f32 %v572, %v751
        %753 = vmatmul.f32.gmra.mxu0 %v657
        %v754 = vpop.f32.mrf.mxu0
        %v755 = vadd.f32 %v575, %v754
        %756 = vmatmul.f32.gmra.mxu0 %v659
        %v757 = vpop.f32.mrf.mxu0
        %v758 = vadd.f32 %v578, %v757
        %759 = vmatmul.f32.gmra.mxu0 %v661
        %v760 = vpop.f32.mrf.mxu0
        %v761 = vadd.f32 %v581, %v760
        %762 = vmatmul.f32.gmra.mxu0 %v663
        %v763 = vpop.f32.mrf.mxu0
        %v764 = vadd.f32 %v584, %v763
        %765 = vmatmul.f32.gmra.mxu0 %v665
        %v766 = vpop.f32.mrf.mxu0
        %v767 = vadd.f32 %v587, %v766
        %768 = vmatmul.f32.gmra.mxu0 %v667
        %v769 = vpop.f32.mrf.mxu0
        %v770 = vadd.f32 %v590, %v769
        %771 = vmatmul.f32.gmra.mxu0 %v669
        %v772 = vpop.f32.mrf.mxu0
        %v773 = vadd.f32 %v593, %v772
        %774 = vmatmul.f32.gmra.mxu0 %v671
        %v775 = vpop.f32.mrf.mxu0
        %v776 = vadd.f32 %v596, %v775
        %777 = vmatmul.f32.gmra.mxu0 %v673
        %v778 = vpop.f32.mrf.mxu0
        %v779 = vadd.f32 %v599, %v778
        %780 = vmatmul.f32.gmra.mxu0 %v675
        %v781 = vpop.f32.mrf.mxu0
        %v782 = vadd.f32 %v602, %v781
        %783 = vmatmul.f32.gmra.mxu0 %v677
        %v784 = vpop.f32.mrf.mxu0
        %v785 = vadd.f32 %v605, %v784
        %786 = vmatmul.f32.gmra.mxu0 %v679
        %v787 = vpop.f32.mrf.mxu0
        %v788 = vadd.f32 %v608, %v787
        %789 = vmatmul.f32.gmra.mxu0 %v681
        %v790 = vpop.f32.mrf.mxu0
        %v791 = vadd.f32 %v611, %v790
        %792 = vmatmul.f32.gmra.mxu0 %v683
        %v793 = vpop.f32.mrf.mxu0
        %v794 = vadd.f32 %v614, %v793
        %795 = vmatmul.f32.gmra.mxu0 %v685
        %v796 = vpop.f32.mrf.mxu0
        %v797 = vadd.f32 %v617, %v796
        %798 = vmatmul.f32.gmra.mxu0 %v687
        %v799 = vpop.f32.mrf.mxu0
        %v800 = vadd.f32 %v620, %v799
        %801 = vmatmul.f32.gmra.mxu0 %v689
        %v802 = vpop.f32.mrf.mxu0
        %v803 = vadd.f32 %v623, %v802
        %804 = vmatmul.f32.gmra.mxu0 %v691
        %v805 = vpop.f32.mrf.mxu0
        %v806 = vadd.f32 %v626, %v805
        %807 = vmatmul.f32.gmra.mxu0 %v693
        %v808 = vpop.f32.mrf.mxu0
        %v809 = vadd.f32 %v629, %v808
        %810 = vdwg.mxu0
        %vm811 = vcmask 1045504
        %v812 = vrot.slane %v263, 2
        %v813 = vrot.slane %v264, 2
        %v814 = vsel %vm811, %v812, %v813
        %v815 = vrot.slane %v265, 2
        %v816 = vsel %vm811, %v813, %v815
        %v817 = vrot.slane %v266, 2
        %v818 = vrot.slane %v267, 2
        %v819 = vsel %vm811, %v817, %v818
        %v820 = vrot.slane %v268, 2
        %v821 = vsel %vm811, %v818, %v820
        %v822 = vrot.slane %v269, 2
        %v823 = vrot.slane %v270, 2
        %v824 = vsel %vm811, %v822, %v823
        %v825 = vrot.slane %v271, 2
        %v826 = vsel %vm811, %v823, %v825
        %v827 = vrot.slane %v272, 2
        %v828 = vrot.slane %v273, 2
        %v829 = vsel %vm811, %v827, %v828
        %v830 = vrot.slane %v274, 2
        %v831 = vsel %vm811, %v828, %v830
        %v832 = vrot.slane %v275, 2
        %v833 = vrot.slane %v276, 2
        %v834 = vsel %vm811, %v832, %v833
        %v835 = vrot.slane %v277, 2
        %v836 = vsel %vm811, %v833, %v835
        %v837 = vrot.slane %v278, 2
        %v838 = vrot.slane %v279, 2
        %v839 = vsel %vm811, %v837, %v838
        %v840 = vrot.slane %v280, 2
        %v841 = vsel %vm811, %v838, %v840
        %v842 = vrot.slane %v281, 2
        %v843 = vrot.slane %v282, 2
        %v844 = vsel %vm811, %v842, %v843
        %v845 = vrot.slane %v283, 2
        %v846 = vsel %vm811, %v843, %v845
        %v847 = vrot.slane %v284, 2
        %v848 = vrot.slane %v285, 2
        %v849 = vsel %vm811, %v847, %v848
        %v850 = vrot.slane %v286, 2
        %v851 = vsel %vm811, %v848, %v850
        %v852 = vrot.slane %v287, 2
        %v853 = vrot.slane %v288, 2
        %v854 = vsel %vm811, %v852, %v853
        %v855 = vrot.slane %v289, 2
        %v856 = vsel %vm811, %v853, %v855
        %v857 = vrot.slane %v290, 2
        %v858 = vrot.slane %v291, 2
        %v859 = vsel %vm811, %v857, %v858
        %v860 = vrot.slane %v292, 2
        %v861 = vsel %vm811, %v858, %v860
        %v862 = vrot.slane %v293, 2
        %v863 = vrot.slane %v294, 2
        %v864 = vsel %vm811, %v862, %v863
        %v865 = vrot.slane %v295, 2
        %v866 = vsel %vm811, %v863, %v865
        %v867 = vrot.slane %v296, 2
        %v868 = vrot.slane %v297, 2
        %v869 = vsel %vm811, %v867, %v868
        %v870 = vrot.slane %v298, 2
        %v871 = vsel %vm811, %v868, %v870
        %v872 = vrot.slane %v299, 2
        %v873 = vrot.slane %v300, 2
        %v874 = vsel %vm811, %v872, %v873
        %v875 = vrot.slane %v301, 2
        %v876 = vsel %vm811, %v873, %v875
        %v877 = vrot.slane %v302, 2
        %v878 = vrot.slane %v303, 2
        %v879 = vsel %vm811, %v877, %v878
        %v880 = vrot.slane %v304, 2
        %v881 = vsel %vm811, %v878, %v880
        %v882 = vrot.slane %v305, 2
        %v883 = vrot.slane %v306, 2
        %v884 = vsel %vm811, %v882, %v883
        %v885 = vrot.slane %v307, 2
        %v886 = vsel %vm811, %v883, %v885
        %v887 = vrot.slane %v308, 2
        %v888 = vrot.slane %v309, 2
        %v889 = vsel %vm811, %v887, %v888
        %v890 = vrot.slane %v310, 2
        %v891 = vsel %vm811, %v888, %v890
        %s892 = scalar_lea.vmem %s1, 8
        %v893 = vld [vmem:[%s892] sm:$0x7]
        %v894 = vsel %vm449, %v814, 0
        %v896 = vsel %vm449, %v816, 0
        %v898 = vsel %vm449, %v819, 0
        %v900 = vsel %vm449, %v821, 0
        %v902 = vsel %vm449, %v824, 0
        %v904 = vsel %vm449, %v826, 0
        %v906 = vsel %vm449, %v829, 0
        %v908 = vsel %vm449, %v831, 0
        %v910 = vsel %vm449, %v834, 0
        %v912 = vsel %vm449, %v836, 0
        %v914 = vsel %vm449, %v839, 0
        %v916 = vsel %vm449, %v841, 0
        %v918 = vsel %vm449, %v844, 0
        %v920 = vsel %vm449, %v846, 0
        %v922 = vsel %vm449, %v849, 0
        %v924 = vsel %vm449, %v851, 0
        %v926 = vsel %vm449, %v854, 0
        %v928 = vsel %vm449, %v856, 0
        %v930 = vsel %vm449, %v859, 0
        %v932 = vsel %vm449, %v861, 0
        %v934 = vsel %vm449, %v864, 0
        %v936 = vsel %vm449, %v866, 0
        %v938 = vsel %vm449, %v869, 0
        %v940 = vsel %vm449, %v871, 0
        %v942 = vsel %vm449, %v874, 0
        %v944 = vsel %vm449, %v876, 0
        %v946 = vsel %vm449, %v879, 0
        %v948 = vsel %vm449, %v881, 0
        %v950 = vsel %vm449, %v884, 0
        %v952 = vsel %vm449, %v886, 0
        %v954 = vsel %vm449, %v889, 0
        %v956 = vsel %vm449, %v891, 0
        %v959 = vsel %vm514, %v893, 0
        %961 = vmatpush.msra.mxu0 0.0
        %962 = vmatpush.msra.mxu0 0.0
        %963 = vmatpush.msra.mxu0 0.0
        %964 = vmatpush.msra.mxu0 0.0
        %965 = vmatpush.msra.mxu0 0.0
        %966 = vmatpush.msra.mxu0 0.0
        %967 = vmatpush.msra.mxu0 0.0
        %968 = vmatpush.msra.mxu0 0.0
        %969 = vmatpush.msra.mxu0 0.0
        %970 = vmatpush.msra.mxu0 0.0
        %971 = vmatpush.msra.mxu0 0.0
        %972 = vmatpush.msra.mxu0 0.0
        %973 = vmatpush.msra.mxu0 0.0
        %974 = vmatpush.msra.mxu0 0.0
        %975 = vmatpush.msra.mxu0 0.0
        %976 = vmatpush.msra.mxu0 %v959
        %977 = vmatmul.f32.gmra.mxu0 %v894
        %v978 = vpop.f32.mrf.mxu0
        %v979 = vadd.f32 0.0, %v978
        %980 = vmatmul.f32.gmra.mxu0 %v896
        %v981 = vpop.f32.mrf.mxu0
        %v982 = vadd.f32 0.0, %v981
        %983 = vmatmul.f32.gmra.mxu0 %v898
        %v984 = vpop.f32.mrf.mxu0
        %v985 = vadd.f32 0.0, %v984
        %986 = vmatmul.f32.gmra.mxu0 %v900
        %v987 = vpop.f32.mrf.mxu0
        %v988 = vadd.f32 0.0, %v987
        %989 = vmatmul.f32.gmra.mxu0 %v902
        %v990 = vpop.f32.mrf.mxu0
        %v991 = vadd.f32 0.0, %v990
        %992 = vmatmul.f32.gmra.mxu0 %v904
        %v993 = vpop.f32.mrf.mxu0
        %v994 = vadd.f32 0.0, %v993
        %995 = vmatmul.f32.gmra.mxu0 %v906
        %v996 = vpop.f32.mrf.mxu0
        %v997 = vadd.f32 0.0, %v996
        %998 = vmatmul.f32.gmra.mxu0 %v908
        %v999 = vpop.f32.mrf.mxu0
        %v1000 = vadd.f32 0.0, %v999
        %1001 = vmatmul.f32.gmra.mxu0 %v910
        %v1002 = vpop.f32.mrf.mxu0
        %v1003 = vadd.f32 0.0, %v1002
        %1004 = vmatmul.f32.gmra.mxu0 %v912
        %v1005 = vpop.f32.mrf.mxu0
        %v1006 = vadd.f32 0.0, %v1005
        %1007 = vmatmul.f32.gmra.mxu0 %v914
        %v1008 = vpop.f32.mrf.mxu0
        %v1009 = vadd.f32 0.0, %v1008
        %1010 = vmatmul.f32.gmra.mxu0 %v916
        %v1011 = vpop.f32.mrf.mxu0
        %v1012 = vadd.f32 0.0, %v1011
        %1013 = vmatmul.f32.gmra.mxu0 %v918
        %v1014 = vpop.f32.mrf.mxu0
        %v1015 = vadd.f32 0.0, %v1014
        %1016 = vmatmul.f32.gmra.mxu0 %v920
        %v1017 = vpop.f32.mrf.mxu0
        %v1018 = vadd.f32 0.0, %v1017
        %1019 = vmatmul.f32.gmra.mxu0 %v922
        %v1020 = vpop.f32.mrf.mxu0
        %v1021 = vadd.f32 0.0, %v1020
        %1022 = vmatmul.f32.gmra.mxu0 %v924
        %v1023 = vpop.f32.mrf.mxu0
        %v1024 = vadd.f32 0.0, %v1023
        %1025 = vmatmul.f32.gmra.mxu0 %v926
        %v1026 = vpop.f32.mrf.mxu0
        %v1027 = vadd.f32 0.0, %v1026
        %1028 = vmatmul.f32.gmra.mxu0 %v928
        %v1029 = vpop.f32.mrf.mxu0
        %v1030 = vadd.f32 0.0, %v1029
        %1031 = vmatmul.f32.gmra.mxu0 %v930
        %v1032 = vpop.f32.mrf.mxu0
        %v1033 = vadd.f32 0.0, %v1032
        %1034 = vmatmul.f32.gmra.mxu0 %v932
        %v1035 = vpop.f32.mrf.mxu0
        %v1036 = vadd.f32 0.0, %v1035
        %1037 = vmatmul.f32.gmra.mxu0 %v934
        %v1038 = vpop.f32.mrf.mxu0
        %v1039 = vadd.f32 0.0, %v1038
        %1040 = vmatmul.f32.gmra.mxu0 %v936
        %v1041 = vpop.f32.mrf.mxu0
        %v1042 = vadd.f32 0.0, %v1041
        %1043 = vmatmul.f32.gmra.mxu0 %v938
        %v1044 = vpop.f32.mrf.mxu0
        %v1045 = vadd.f32 0.0, %v1044
        %1046 = vmatmul.f32.gmra.mxu0 %v940
        %v1047 = vpop.f32.mrf.mxu0
        %v1048 = vadd.f32 0.0, %v1047
        %1049 = vmatmul.f32.gmra.mxu0 %v942
        %v1050 = vpop.f32.mrf.mxu0
        %v1051 = vadd.f32 0.0, %v1050
        %1052 = vmatmul.f32.gmra.mxu0 %v944
        %v1053 = vpop.f32.mrf.mxu0
        %v1054 = vadd.f32 0.0, %v1053
        %1055 = vmatmul.f32.gmra.mxu0 %v946
        %v1056 = vpop.f32.mrf.mxu0
        %v1057 = vadd.f32 0.0, %v1056
        %1058 = vmatmul.f32.gmra.mxu0 %v948
        %v1059 = vpop.f32.mrf.mxu0
        %v1060 = vadd.f32 0.0, %v1059
        %1061 = vmatmul.f32.gmra.mxu0 %v950
        %v1062 = vpop.f32.mrf.mxu0
        %v1063 = vadd.f32 0.0, %v1062
        %1064 = vmatmul.f32.gmra.mxu0 %v952
        %v1065 = vpop.f32.mrf.mxu0
        %v1066 = vadd.f32 0.0, %v1065
        %1067 = vmatmul.f32.gmra.mxu0 %v954
        %v1068 = vpop.f32.mrf.mxu0
        %v1069 = vadd.f32 0.0, %v1068
        %1070 = vmatmul.f32.gmra.mxu0 %v956
        %v1071 = vpop.f32.mrf.mxu0
        %v1072 = vadd.f32 0.0, %v1071
        %1073 = vdwg.mxu0
        %v1074 = vadd.f32 %v716, %v979
        %v1075 = vadd.f32 %v719, %v982
        %v1076 = vadd.f32 %v722, %v985
        %v1077 = vadd.f32 %v725, %v988
        %v1078 = vadd.f32 %v728, %v991
        %v1079 = vadd.f32 %v731, %v994
        %v1080 = vadd.f32 %v734, %v997
        %v1081 = vadd.f32 %v737, %v1000
        %v1082 = vadd.f32 %v740, %v1003
        %v1083 = vadd.f32 %v743, %v1006
        %v1084 = vadd.f32 %v746, %v1009
        %v1085 = vadd.f32 %v749, %v1012
        %v1086 = vadd.f32 %v752, %v1015
        %v1087 = vadd.f32 %v755, %v1018
        %v1088 = vadd.f32 %v758, %v1021
        %v1089 = vadd.f32 %v761, %v1024
        %v1090 = vadd.f32 %v764, %v1027
        %v1091 = vadd.f32 %v767, %v1030
        %v1092 = vadd.f32 %v770, %v1033
        %v1093 = vadd.f32 %v773, %v1036
        %v1094 = vadd.f32 %v776, %v1039
        %v1095 = vadd.f32 %v779, %v1042
        %v1096 = vadd.f32 %v782, %v1045
        %v1097 = vadd.f32 %v785, %v1048
        %v1098 = vadd.f32 %v788, %v1051
        %v1099 = vadd.f32 %v791, %v1054
        %v1100 = vadd.f32 %v794, %v1057
        %v1101 = vadd.f32 %v797, %v1060
        %v1102 = vadd.f32 %v800, %v1063
        %v1103 = vadd.f32 %v803, %v1066
        %v1104 = vadd.f32 %v806, %v1069
        %v1105 = vadd.f32 %v809, %v1072
        %s1106 = scalar_lea.vmem %s1, 12
        %v1107 = vld [vmem:[%s1106] sm:$0x7]
        %v1109 = vsel %vm449, %v311, 0
        %v1112 = vsel %vm449, %v312, 0
        %v1115 = vsel %vm514, %v1107, 0
        %1117 = vmatpush.msra.mxu0 0.0
        %1118 = vmatpush.msra.mxu0 0.0
        %1119 = vmatpush.msra.mxu0 0.0
        %1120 = vmatpush.msra.mxu0 0.0
        %1121 = vmatpush.msra.mxu0 0.0
        %1122 = vmatpush.msra.mxu0 0.0
        %1123 = vmatpush.msra.mxu0 0.0
        %1124 = vmatpush.msra.mxu0 0.0
        %1125 = vmatpush.msra.mxu0 0.0
        %1126 = vmatpush.msra.mxu0 0.0
        %1127 = vmatpush.msra.mxu0 0.0
        %1128 = vmatpush.msra.mxu0 0.0
        %1129 = vmatpush.msra.mxu0 0.0
        %1130 = vmatpush.msra.mxu0 0.0
        %1131 = vmatpush.msra.mxu0 0.0
        %1132 = vmatpush.msra.mxu0 %v1115
        %1133 = vmatmul.f32.gmra.mxu0 %v635
        %v1134 = vpop.f32.mrf.mxu0
        %v1135 = vadd.f32 0.0, %v1134
        %1136 = vmatmul.f32.gmra.mxu0 %v637
        %v1137 = vpop.f32.mrf.mxu0
        %v1138 = vadd.f32 0.0, %v1137
        %1139 = vmatmul.f32.gmra.mxu0 %v639
        %v1140 = vpop.f32.mrf.mxu0
        %v1141 = vadd.f32 0.0, %v1140
        %1142 = vmatmul.f32.gmra.mxu0 %v641
        %v1143 = vpop.f32.mrf.mxu0
        %v1144 = vadd.f32 0.0, %v1143
        %1145 = vmatmul.f32.gmra.mxu0 %v643
        %v1146 = vpop.f32.mrf.mxu0
        %v1147 = vadd.f32 0.0, %v1146
        %1148 = vmatmul.f32.gmra.mxu0 %v645
        %v1149 = vpop.f32.mrf.mxu0
        %v1150 = vadd.f32 0.0, %v1149
        %1151 = vmatmul.f32.gmra.mxu0 %v647
        %v1152 = vpop.f32.mrf.mxu0
        %v1153 = vadd.f32 0.0, %v1152
        %1154 = vmatmul.f32.gmra.mxu0 %v649
        %v1155 = vpop.f32.mrf.mxu0
        %v1156 = vadd.f32 0.0, %v1155
        %1157 = vmatmul.f32.gmra.mxu0 %v651
        %v1158 = vpop.f32.mrf.mxu0
        %v1159 = vadd.f32 0.0, %v1158
        %1160 = vmatmul.f32.gmra.mxu0 %v653
        %v1161 = vpop.f32.mrf.mxu0
        %v1162 = vadd.f32 0.0, %v1161
        %1163 = vmatmul.f32.gmra.mxu0 %v655
        %v1164 = vpop.f32.mrf.mxu0
        %v1165 = vadd.f32 0.0, %v1164
        %1166 = vmatmul.f32.gmra.mxu0 %v657
        %v1167 = vpop.f32.mrf.mxu0
        %v1168 = vadd.f32 0.0, %v1167
        %1169 = vmatmul.f32.gmra.mxu0 %v659
        %v1170 = vpop.f32.mrf.mxu0
        %v1171 = vadd.f32 0.0, %v1170
        %1172 = vmatmul.f32.gmra.mxu0 %v661
        %v1173 = vpop.f32.mrf.mxu0
        %v1174 = vadd.f32 0.0, %v1173
        %1175 = vmatmul.f32.gmra.mxu0 %v663
        %v1176 = vpop.f32.mrf.mxu0
        %v1177 = vadd.f32 0.0, %v1176
        %1178 = vmatmul.f32.gmra.mxu0 %v665
        %v1179 = vpop.f32.mrf.mxu0
        %v1180 = vadd.f32 0.0, %v1179
        %1181 = vmatmul.f32.gmra.mxu0 %v667
        %v1182 = vpop.f32.mrf.mxu0
        %v1183 = vadd.f32 0.0, %v1182
        %1184 = vmatmul.f32.gmra.mxu0 %v669
        %v1185 = vpop.f32.mrf.mxu0
        %v1186 = vadd.f32 0.0, %v1185
        %1187 = vmatmul.f32.gmra.mxu0 %v671
        %v1188 = vpop.f32.mrf.mxu0
        %v1189 = vadd.f32 0.0, %v1188
        %1190 = vmatmul.f32.gmra.mxu0 %v673
        %v1191 = vpop.f32.mrf.mxu0
        %v1192 = vadd.f32 0.0, %v1191
        %1193 = vmatmul.f32.gmra.mxu0 %v675
        %v1194 = vpop.f32.mrf.mxu0
        %v1195 = vadd.f32 0.0, %v1194
        %1196 = vmatmul.f32.gmra.mxu0 %v677
        %v1197 = vpop.f32.mrf.mxu0
        %v1198 = vadd.f32 0.0, %v1197
        %1199 = vmatmul.f32.gmra.mxu0 %v679
        %v1200 = vpop.f32.mrf.mxu0
        %v1201 = vadd.f32 0.0, %v1200
        %1202 = vmatmul.f32.gmra.mxu0 %v681
        %v1203 = vpop.f32.mrf.mxu0
        %v1204 = vadd.f32 0.0, %v1203
        %1205 = vmatmul.f32.gmra.mxu0 %v683
        %v1206 = vpop.f32.mrf.mxu0
        %v1207 = vadd.f32 0.0, %v1206
        %1208 = vmatmul.f32.gmra.mxu0 %v685
        %v1209 = vpop.f32.mrf.mxu0
        %v1210 = vadd.f32 0.0, %v1209
        %1211 = vmatmul.f32.gmra.mxu0 %v687
        %v1212 = vpop.f32.mrf.mxu0
        %v1213 = vadd.f32 0.0, %v1212
        %1214 = vmatmul.f32.gmra.mxu0 %v689
        %v1215 = vpop.f32.mrf.mxu0
        %v1216 = vadd.f32 0.0, %v1215
        %1217 = vmatmul.f32.gmra.mxu0 %v691
        %v1218 = vpop.f32.mrf.mxu0
        %v1219 = vadd.f32 0.0, %v1218
        %1220 = vmatmul.f32.gmra.mxu0 %v693
        %v1221 = vpop.f32.mrf.mxu0
        %v1222 = vadd.f32 0.0, %v1221
        %1223 = vmatmul.f32.gmra.mxu0 %v1109
        %v1224 = vpop.f32.mrf.mxu0
        %v1225 = vadd.f32 0.0, %v1224
        %1226 = vmatmul.f32.gmra.mxu0 %v1112
        %v1227 = vpop.f32.mrf.mxu0
        %v1228 = vadd.f32 0.0, %v1227
        %1229 = vdwg.mxu0
        %v1230 = vadd.f32 %v1074, %v1135
        %v1231 = vadd.f32 %v1075, %v1138
        %v1232 = vadd.f32 %v1076, %v1141
        %v1233 = vadd.f32 %v1077, %v1144
        %v1234 = vadd.f32 %v1078, %v1147
        %v1235 = vadd.f32 %v1079, %v1150
        %v1236 = vadd.f32 %v1080, %v1153
        %v1237 = vadd.f32 %v1081, %v1156
        %v1238 = vadd.f32 %v1082, %v1159
        %v1239 = vadd.f32 %v1083, %v1162
        %v1240 = vadd.f32 %v1084, %v1165
        %v1241 = vadd.f32 %v1085, %v1168
        %v1242 = vadd.f32 %v1086, %v1171
        %v1243 = vadd.f32 %v1087, %v1174
        %v1244 = vadd.f32 %v1088, %v1177
        %v1245 = vadd.f32 %v1089, %v1180
        %v1246 = vadd.f32 %v1090, %v1183
        %v1247 = vadd.f32 %v1091, %v1186
        %v1248 = vadd.f32 %v1092, %v1189
        %v1249 = vadd.f32 %v1093, %v1192
        %v1250 = vadd.f32 %v1094, %v1195
        %v1251 = vadd.f32 %v1095, %v1198
        %v1252 = vadd.f32 %v1096, %v1201
        %v1253 = vadd.f32 %v1097, %v1204
        %v1254 = vadd.f32 %v1098, %v1207
        %v1255 = vadd.f32 %v1099, %v1210
        %v1256 = vadd.f32 %v1100, %v1213
        %v1257 = vadd.f32 %v1101, %v1216
        %v1258 = vadd.f32 %v1102, %v1219
        %v1259 = vadd.f32 %v1103, %v1222
        %v1260 = vadd.f32 %v1104, %v1225
        %v1261 = vadd.f32 %v1105, %v1228
        %v1263 = vrot.slane %v311, 1
        %v1264 = vrot.slane %v312, 1
        %v1265 = vsel %vm366, %v1263, %v1264
        %v1266 = vrot.slane %v313, 1
        %v1267 = vsel %vm366, %v1264, %v1266
        %s1268 = scalar_lea.vmem %s1, 16
        %v1269 = vld [vmem:[%s1268] sm:$0x7]
        %v1270 = vsel %vm449, %v1265, 0
        %v1272 = vsel %vm449, %v1267, 0
        %v1275 = vsel %vm514, %v1269, 0
        %1277 = vmatpush.msra.mxu0 0.0
        %1278 = vmatpush.msra.mxu0 0.0
        %1279 = vmatpush.msra.mxu0 0.0
        %1280 = vmatpush.msra.mxu0 0.0
        %1281 = vmatpush.msra.mxu0 0.0
        %1282 = vmatpush.msra.mxu0 0.0
        %1283 = vmatpush.msra.mxu0 0.0
        %1284 = vmatpush.msra.mxu0 0.0
        %1285 = vmatpush.msra.mxu0 0.0
        %1286 = vmatpush.msra.mxu0 0.0
        %1287 = vmatpush.msra.mxu0 0.0
        %1288 = vmatpush.msra.mxu0 0.0
        %1289 = vmatpush.msra.mxu0 0.0
        %1290 = vmatpush.msra.mxu0 0.0
        %1291 = vmatpush.msra.mxu0 0.0
        %1292 = vmatpush.msra.mxu0 %v1275
        %1293 = vmatmul.f32.gmra.mxu0 %v454
        %v1294 = vpop.f32.mrf.mxu0
        %v1295 = vadd.f32 0.0, %v1294
        %1296 = vmatmul.f32.gmra.mxu0 %v456
        %v1297 = vpop.f32.mrf.mxu0
        %v1298 = vadd.f32 0.0, %v1297
        %1299 = vmatmul.f32.gmra.mxu0 %v458
        %v1300 = vpop.f32.mrf.mxu0
        %v1301 = vadd.f32 0.0, %v1300
        %1302 = vmatmul.f32.gmra.mxu0 %v460
        %v1303 = vpop.f32.mrf.mxu0
        %v1304 = vadd.f32 0.0, %v1303
        %1305 = vmatmul.f32.gmra.mxu0 %v462
        %v1306 = vpop.f32.mrf.mxu0
        %v1307 = vadd.f32 0.0, %v1306
        %1308 = vmatmul.f32.gmra.mxu0 %v464
        %v1309 = vpop.f32.mrf.mxu0
        %v1310 = vadd.f32 0.0, %v1309
        %1311 = vmatmul.f32.gmra.mxu0 %v466
        %v1312 = vpop.f32.mrf.mxu0
        %v1313 = vadd.f32 0.0, %v1312
        %1314 = vmatmul.f32.gmra.mxu0 %v468
        %v1315 = vpop.f32.mrf.mxu0
        %v1316 = vadd.f32 0.0, %v1315
        %1317 = vmatmul.f32.gmra.mxu0 %v470
        %v1318 = vpop.f32.mrf.mxu0
        %v1319 = vadd.f32 0.0, %v1318
        %1320 = vmatmul.f32.gmra.mxu0 %v472
        %v1321 = vpop.f32.mrf.mxu0
        %v1322 = vadd.f32 0.0, %v1321
        %1323 = vmatmul.f32.gmra.mxu0 %v474
        %v1324 = vpop.f32.mrf.mxu0
        %v1325 = vadd.f32 0.0, %v1324
        %1326 = vmatmul.f32.gmra.mxu0 %v476
        %v1327 = vpop.f32.mrf.mxu0
        %v1328 = vadd.f32 0.0, %v1327
        %1329 = vmatmul.f32.gmra.mxu0 %v478
        %v1330 = vpop.f32.mrf.mxu0
        %v1331 = vadd.f32 0.0, %v1330
        %1332 = vmatmul.f32.gmra.mxu0 %v480
        %v1333 = vpop.f32.mrf.mxu0
        %v1334 = vadd.f32 0.0, %v1333
        %1335 = vmatmul.f32.gmra.mxu0 %v482
        %v1336 = vpop.f32.mrf.mxu0
        %v1337 = vadd.f32 0.0, %v1336
        %1338 = vmatmul.f32.gmra.mxu0 %v484
        %v1339 = vpop.f32.mrf.mxu0
        %v1340 = vadd.f32 0.0, %v1339
        %1341 = vmatmul.f32.gmra.mxu0 %v486
        %v1342 = vpop.f32.mrf.mxu0
        %v1343 = vadd.f32 0.0, %v1342
        %1344 = vmatmul.f32.gmra.mxu0 %v488
        %v1345 = vpop.f32.mrf.mxu0
        %v1346 = vadd.f32 0.0, %v1345
        %1347 = vmatmul.f32.gmra.mxu0 %v490
        %v1348 = vpop.f32.mrf.mxu0
        %v1349 = vadd.f32 0.0, %v1348
        %1350 = vmatmul.f32.gmra.mxu0 %v492
        %v1351 = vpop.f32.mrf.mxu0
        %v1352 = vadd.f32 0.0, %v1351
        %1353 = vmatmul.f32.gmra.mxu0 %v494
        %v1354 = vpop.f32.mrf.mxu0
        %v1355 = vadd.f32 0.0, %v1354
        %1356 = vmatmul.f32.gmra.mxu0 %v496
        %v1357 = vpop.f32.mrf.mxu0
        %v1358 = vadd.f32 0.0, %v1357
        %1359 = vmatmul.f32.gmra.mxu0 %v498
        %v1360 = vpop.f32.mrf.mxu0
        %v1361 = vadd.f32 0.0, %v1360
        %1362 = vmatmul.f32.gmra.mxu0 %v500
        %v1363 = vpop.f32.mrf.mxu0
        %v1364 = vadd.f32 0.0, %v1363
        %1365 = vmatmul.f32.gmra.mxu0 %v502
        %v1366 = vpop.f32.mrf.mxu0
        %v1367 = vadd.f32 0.0, %v1366
        %1368 = vmatmul.f32.gmra.mxu0 %v504
        %v1369 = vpop.f32.mrf.mxu0
        %v1370 = vadd.f32 0.0, %v1369
        %1371 = vmatmul.f32.gmra.mxu0 %v506
        %v1372 = vpop.f32.mrf.mxu0
        %v1373 = vadd.f32 0.0, %v1372
        %1374 = vmatmul.f32.gmra.mxu0 %v508
        %v1375 = vpop.f32.mrf.mxu0
        %v1376 = vadd.f32 0.0, %v1375
        %1377 = vmatmul.f32.gmra.mxu0 %v510
        %v1378 = vpop.f32.mrf.mxu0
        %v1379 = vadd.f32 0.0, %v1378
        %1380 = vmatmul.f32.gmra.mxu0 %v512
        %v1381 = vpop.f32.mrf.mxu0
        %v1382 = vadd.f32 0.0, %v1381
        %1383 = vmatmul.f32.gmra.mxu0 %v1270
        %v1384 = vpop.f32.mrf.mxu0
        %v1385 = vadd.f32 0.0, %v1384
        %1386 = vmatmul.f32.gmra.mxu0 %v1272
        %v1387 = vpop.f32.mrf.mxu0
        %v1388 = vadd.f32 0.0, %v1387
        %1389 = vdwg.mxu0
        %v1390 = vadd.f32 %v1230, %v1295
        %v1391 = vadd.f32 %v1231, %v1298
        %v1392 = vadd.f32 %v1232, %v1301
        %v1393 = vadd.f32 %v1233, %v1304
        %v1394 = vadd.f32 %v1234, %v1307
        %v1395 = vadd.f32 %v1235, %v1310
        %v1396 = vadd.f32 %v1236, %v1313
        %v1397 = vadd.f32 %v1237, %v1316
        %v1398 = vadd.f32 %v1238, %v1319
        %v1399 = vadd.f32 %v1239, %v1322
        %v1400 = vadd.f32 %v1240, %v1325
        %v1401 = vadd.f32 %v1241, %v1328
        %v1402 = vadd.f32 %v1242, %v1331
        %v1403 = vadd.f32 %v1243, %v1334
        %v1404 = vadd.f32 %v1244, %v1337
        %v1405 = vadd.f32 %v1245, %v1340
        %v1406 = vadd.f32 %v1246, %v1343
        %v1407 = vadd.f32 %v1247, %v1346
        %v1408 = vadd.f32 %v1248, %v1349
        %v1409 = vadd.f32 %v1249, %v1352
        %v1410 = vadd.f32 %v1250, %v1355
        %v1411 = vadd.f32 %v1251, %v1358
        %v1412 = vadd.f32 %v1252, %v1361
        %v1413 = vadd.f32 %v1253, %v1364
        %v1414 = vadd.f32 %v1254, %v1367
        %v1415 = vadd.f32 %v1255, %v1370
        %v1416 = vadd.f32 %v1256, %v1373
        %v1417 = vadd.f32 %v1257, %v1376
        %v1418 = vadd.f32 %v1258, %v1379
        %v1419 = vadd.f32 %v1259, %v1382
        %v1420 = vadd.f32 %v1260, %v1385
        %v1421 = vadd.f32 %v1261, %v1388
        %v1422 = vrot.slane %v311, 2
        %v1423 = vrot.slane %v312, 2
        %v1424 = vsel %vm811, %v1422, %v1423
        %v1425 = vrot.slane %v313, 2
        %v1426 = vsel %vm811, %v1423, %v1425
        %s1427 = scalar_lea.vmem %s1, 20
        %v1428 = vld [vmem:[%s1427] sm:$0x7]
        %v1429 = vsel %vm449, %v1424, 0
        %v1431 = vsel %vm449, %v1426, 0
        %v1434 = vsel %vm514, %v1428, 0
        %1436 = vmatpush.msra.mxu0 0.0
        %1437 = vmatpush.msra.mxu0 0.0
        %1438 = vmatpush.msra.mxu0 0.0
        %1439 = vmatpush.msra.mxu0 0.0
        %1440 = vmatpush.msra.mxu0 0.0
        %1441 = vmatpush.msra.mxu0 0.0
        %1442 = vmatpush.msra.mxu0 0.0
        %1443 = vmatpush.msra.mxu0 0.0
        %1444 = vmatpush.msra.mxu0 0.0
        %1445 = vmatpush.msra.mxu0 0.0
        %1446 = vmatpush.msra.mxu0 0.0
        %1447 = vmatpush.msra.mxu0 0.0
        %1448 = vmatpush.msra.mxu0 0.0
        %1449 = vmatpush.msra.mxu0 0.0
        %1450 = vmatpush.msra.mxu0 0.0
        %1451 = vmatpush.msra.mxu0 %v1434
        %1452 = vmatmul.f32.gmra.mxu0 %v898
        %v1453 = vpop.f32.mrf.mxu0
        %v1454 = vadd.f32 0.0, %v1453
        %1455 = vmatmul.f32.gmra.mxu0 %v900
        %v1456 = vpop.f32.mrf.mxu0
        %v1457 = vadd.f32 0.0, %v1456
        %1458 = vmatmul.f32.gmra.mxu0 %v902
        %v1459 = vpop.f32.mrf.mxu0
        %v1460 = vadd.f32 0.0, %v1459
        %1461 = vmatmul.f32.gmra.mxu0 %v904
        %v1462 = vpop.f32.mrf.mxu0
        %v1463 = vadd.f32 0.0, %v1462
        %1464 = vmatmul.f32.gmra.mxu0 %v906
        %v1465 = vpop.f32.mrf.mxu0
        %v1466 = vadd.f32 0.0, %v1465
        %1467 = vmatmul.f32.gmra.mxu0 %v908
        %v1468 = vpop.f32.mrf.mxu0
        %v1469 = vadd.f32 0.0, %v1468
        %1470 = vmatmul.f32.gmra.mxu0 %v910
        %v1471 = vpop.f32.mrf.mxu0
        %v1472 = vadd.f32 0.0, %v1471
        %1473 = vmatmul.f32.gmra.mxu0 %v912
        %v1474 = vpop.f32.mrf.mxu0
        %v1475 = vadd.f32 0.0, %v1474
        %1476 = vmatmul.f32.gmra.mxu0 %v914
        %v1477 = vpop.f32.mrf.mxu0
        %v1478 = vadd.f32 0.0, %v1477
        %1479 = vmatmul.f32.gmra.mxu0 %v916
        %v1480 = vpop.f32.mrf.mxu0
        %v1481 = vadd.f32 0.0, %v1480
        %1482 = vmatmul.f32.gmra.mxu0 %v918
        %v1483 = vpop.f32.mrf.mxu0
        %v1484 = vadd.f32 0.0, %v1483
        %1485 = vmatmul.f32.gmra.mxu0 %v920
        %v1486 = vpop.f32.mrf.mxu0
        %v1487 = vadd.f32 0.0, %v1486
        %1488 = vmatmul.f32.gmra.mxu0 %v922
        %v1489 = vpop.f32.mrf.mxu0
        %v1490 = vadd.f32 0.0, %v1489
        %1491 = vmatmul.f32.gmra.mxu0 %v924
        %v1492 = vpop.f32.mrf.mxu0
        %v1493 = vadd.f32 0.0, %v1492
        %1494 = vmatmul.f32.gmra.mxu0 %v926
        %v1495 = vpop.f32.mrf.mxu0
        %v1496 = vadd.f32 0.0, %v1495
        %1497 = vmatmul.f32.gmra.mxu0 %v928
        %v1498 = vpop.f32.mrf.mxu0
        %v1499 = vadd.f32 0.0, %v1498
        %1500 = vmatmul.f32.gmra.mxu0 %v930
        %v1501 = vpop.f32.mrf.mxu0
        %v1502 = vadd.f32 0.0, %v1501
        %1503 = vmatmul.f32.gmra.mxu0 %v932
        %v1504 = vpop.f32.mrf.mxu0
        %v1505 = vadd.f32 0.0, %v1504
        %1506 = vmatmul.f32.gmra.mxu0 %v934
        %v1507 = vpop.f32.mrf.mxu0
        %v1508 = vadd.f32 0.0, %v1507
        %1509 = vmatmul.f32.gmra.mxu0 %v936
        %v1510 = vpop.f32.mrf.mxu0
        %v1511 = vadd.f32 0.0, %v1510
        %1512 = vmatmul.f32.gmra.mxu0 %v938
        %v1513 = vpop.f32.mrf.mxu0
        %v1514 = vadd.f32 0.0, %v1513
        %1515 = vmatmul.f32.gmra.mxu0 %v940
        %v1516 = vpop.f32.mrf.mxu0
        %v1517 = vadd.f32 0.0, %v1516
        %1518 = vmatmul.f32.gmra.mxu0 %v942
        %v1519 = vpop.f32.mrf.mxu0
        %v1520 = vadd.f32 0.0, %v1519
        %1521 = vmatmul.f32.gmra.mxu0 %v944
        %v1522 = vpop.f32.mrf.mxu0
        %v1523 = vadd.f32 0.0, %v1522
        %1524 = vmatmul.f32.gmra.mxu0 %v946
        %v1525 = vpop.f32.mrf.mxu0
        %v1526 = vadd.f32 0.0, %v1525
        %1527 = vmatmul.f32.gmra.mxu0 %v948
        %v1528 = vpop.f32.mrf.mxu0
        %v1529 = vadd.f32 0.0, %v1528
        %1530 = vmatmul.f32.gmra.mxu0 %v950
        %v1531 = vpop.f32.mrf.mxu0
        %v1532 = vadd.f32 0.0, %v1531
        %1533 = vmatmul.f32.gmra.mxu0 %v952
        %v1534 = vpop.f32.mrf.mxu0
        %v1535 = vadd.f32 0.0, %v1534
        %1536 = vmatmul.f32.gmra.mxu0 %v954
        %v1537 = vpop.f32.mrf.mxu0
        %v1538 = vadd.f32 0.0, %v1537
        %1539 = vmatmul.f32.gmra.mxu0 %v956
        %v1540 = vpop.f32.mrf.mxu0
        %v1541 = vadd.f32 0.0, %v1540
        %1542 = vmatmul.f32.gmra.mxu0 %v1429
        %v1543 = vpop.f32.mrf.mxu0
        %v1544 = vadd.f32 0.0, %v1543
        %1545 = vmatmul.f32.gmra.mxu0 %v1431
        %v1546 = vpop.f32.mrf.mxu0
        %v1547 = vadd.f32 0.0, %v1546
        %1548 = vdwg.mxu0
        %v1549 = vadd.f32 %v1390, %v1454
        %v1550 = vadd.f32 %v1391, %v1457
        %v1551 = vadd.f32 %v1392, %v1460
        %v1552 = vadd.f32 %v1393, %v1463
        %v1553 = vadd.f32 %v1394, %v1466
        %v1554 = vadd.f32 %v1395, %v1469
        %v1555 = vadd.f32 %v1396, %v1472
        %v1556 = vadd.f32 %v1397, %v1475
        %v1557 = vadd.f32 %v1398, %v1478
        %v1558 = vadd.f32 %v1399, %v1481
        %v1559 = vadd.f32 %v1400, %v1484
        %v1560 = vadd.f32 %v1401, %v1487
        %v1561 = vadd.f32 %v1402, %v1490
        %v1562 = vadd.f32 %v1403, %v1493
        %v1563 = vadd.f32 %v1404, %v1496
        %v1564 = vadd.f32 %v1405, %v1499
        %v1565 = vadd.f32 %v1406, %v1502
        %v1566 = vadd.f32 %v1407, %v1505
        %v1567 = vadd.f32 %v1408, %v1508
        %v1568 = vadd.f32 %v1409, %v1511
        %v1569 = vadd.f32 %v1410, %v1514
        %v1570 = vadd.f32 %v1411, %v1517
        %v1571 = vadd.f32 %v1412, %v1520
        %v1572 = vadd.f32 %v1413, %v1523
        %v1573 = vadd.f32 %v1414, %v1526
        %v1574 = vadd.f32 %v1415, %v1529
        %v1575 = vadd.f32 %v1416, %v1532
        %v1576 = vadd.f32 %v1417, %v1535
        %v1577 = vadd.f32 %v1418, %v1538
        %v1578 = vadd.f32 %v1419, %v1541
        %v1579 = vadd.f32 %v1420, %v1544
        %v1580 = vadd.f32 %v1421, %v1547
        %s1581 = scalar_lea.vmem %s1, 24
        %v1582 = vld [vmem:[%s1581] sm:$0x7]
        %v1584 = vsel %vm449, %v314, 0
        %v1587 = vsel %vm449, %v315, 0
        %v1590 = vsel %vm514, %v1582, 0
        %1592 = vmatpush.msra.mxu0 0.0
        %1593 = vmatpush.msra.mxu0 0.0
        %1594 = vmatpush.msra.mxu0 0.0
        %1595 = vmatpush.msra.mxu0 0.0
        %1596 = vmatpush.msra.mxu0 0.0
        %1597 = vmatpush.msra.mxu0 0.0
        %1598 = vmatpush.msra.mxu0 0.0
        %1599 = vmatpush.msra.mxu0 0.0
        %1600 = vmatpush.msra.mxu0 0.0
        %1601 = vmatpush.msra.mxu0 0.0
        %1602 = vmatpush.msra.mxu0 0.0
        %1603 = vmatpush.msra.mxu0 0.0
        %1604 = vmatpush.msra.mxu0 0.0
        %1605 = vmatpush.msra.mxu0 0.0
        %1606 = vmatpush.msra.mxu0 0.0
        %1607 = vmatpush.msra.mxu0 %v1590
        %1608 = vmatmul.f32.gmra.mxu0 %v639
        %v1609 = vpop.f32.mrf.mxu0
        %v1610 = vadd.f32 0.0, %v1609
        %1611 = vmatmul.f32.gmra.mxu0 %v641
        %v1612 = vpop.f32.mrf.mxu0
        %v1613 = vadd.f32 0.0, %v1612
        %1614 = vmatmul.f32.gmra.mxu0 %v643
        %v1615 = vpop.f32.mrf.mxu0
        %v1616 = vadd.f32 0.0, %v1615
        %1617 = vmatmul.f32.gmra.mxu0 %v645
        %v1618 = vpop.f32.mrf.mxu0
        %v1619 = vadd.f32 0.0, %v1618
        %1620 = vmatmul.f32.gmra.mxu0 %v647
        %v1621 = vpop.f32.mrf.mxu0
        %v1622 = vadd.f32 0.0, %v1621
        %1623 = vmatmul.f32.gmra.mxu0 %v649
        %v1624 = vpop.f32.mrf.mxu0
        %v1625 = vadd.f32 0.0, %v1624
        %1626 = vmatmul.f32.gmra.mxu0 %v651
        %v1627 = vpop.f32.mrf.mxu0
        %v1628 = vadd.f32 0.0, %v1627
        %1629 = vmatmul.f32.gmra.mxu0 %v653
        %v1630 = vpop.f32.mrf.mxu0
        %v1631 = vadd.f32 0.0, %v1630
        %1632 = vmatmul.f32.gmra.mxu0 %v655
        %v1633 = vpop.f32.mrf.mxu0
        %v1634 = vadd.f32 0.0, %v1633
        %1635 = vmatmul.f32.gmra.mxu0 %v657
        %v1636 = vpop.f32.mrf.mxu0
        %v1637 = vadd.f32 0.0, %v1636
        %1638 = vmatmul.f32.gmra.mxu0 %v659
        %v1639 = vpop.f32.mrf.mxu0
        %v1640 = vadd.f32 0.0, %v1639
        %1641 = vmatmul.f32.gmra.mxu0 %v661
        %v1642 = vpop.f32.mrf.mxu0
        %v1643 = vadd.f32 0.0, %v1642
        %1644 = vmatmul.f32.gmra.mxu0 %v663
        %v1645 = vpop.f32.mrf.mxu0
        %v1646 = vadd.f32 0.0, %v1645
        %1647 = vmatmul.f32.gmra.mxu0 %v665
        %v1648 = vpop.f32.mrf.mxu0
        %v1649 = vadd.f32 0.0, %v1648
        %1650 = vmatmul.f32.gmra.mxu0 %v667
        %v1651 = vpop.f32.mrf.mxu0
        %v1652 = vadd.f32 0.0, %v1651
        %1653 = vmatmul.f32.gmra.mxu0 %v669
        %v1654 = vpop.f32.mrf.mxu0
        %v1655 = vadd.f32 0.0, %v1654
        %1656 = vmatmul.f32.gmra.mxu0 %v671
        %v1657 = vpop.f32.mrf.mxu0
        %v1658 = vadd.f32 0.0, %v1657
        %1659 = vmatmul.f32.gmra.mxu0 %v673
        %v1660 = vpop.f32.mrf.mxu0
        %v1661 = vadd.f32 0.0, %v1660
        %1662 = vmatmul.f32.gmra.mxu0 %v675
        %v1663 = vpop.f32.mrf.mxu0
        %v1664 = vadd.f32 0.0, %v1663
        %1665 = vmatmul.f32.gmra.mxu0 %v677
        %v1666 = vpop.f32.mrf.mxu0
        %v1667 = vadd.f32 0.0, %v1666
        %1668 = vmatmul.f32.gmra.mxu0 %v679
        %v1669 = vpop.f32.mrf.mxu0
        %v1670 = vadd.f32 0.0, %v1669
        %1671 = vmatmul.f32.gmra.mxu0 %v681
        %v1672 = vpop.f32.mrf.mxu0
        %v1673 = vadd.f32 0.0, %v1672
        %1674 = vmatmul.f32.gmra.mxu0 %v683
        %v1675 = vpop.f32.mrf.mxu0
        %v1676 = vadd.f32 0.0, %v1675
        %1677 = vmatmul.f32.gmra.mxu0 %v685
        %v1678 = vpop.f32.mrf.mxu0
        %v1679 = vadd.f32 0.0, %v1678
        %1680 = vmatmul.f32.gmra.mxu0 %v687
        %v1681 = vpop.f32.mrf.mxu0
        %v1682 = vadd.f32 0.0, %v1681
        %1683 = vmatmul.f32.gmra.mxu0 %v689
        %v1684 = vpop.f32.mrf.mxu0
        %v1685 = vadd.f32 0.0, %v1684
        %1686 = vmatmul.f32.gmra.mxu0 %v691
        %v1687 = vpop.f32.mrf.mxu0
        %v1688 = vadd.f32 0.0, %v1687
        %1689 = vmatmul.f32.gmra.mxu0 %v693
        %v1690 = vpop.f32.mrf.mxu0
        %v1691 = vadd.f32 0.0, %v1690
        %1692 = vmatmul.f32.gmra.mxu0 %v1109
        %v1693 = vpop.f32.mrf.mxu0
        %v1694 = vadd.f32 0.0, %v1693
        %1695 = vmatmul.f32.gmra.mxu0 %v1112
        %v1696 = vpop.f32.mrf.mxu0
        %v1697 = vadd.f32 0.0, %v1696
        %1698 = vmatmul.f32.gmra.mxu0 %v1584
        %v1699 = vpop.f32.mrf.mxu0
        %v1700 = vadd.f32 0.0, %v1699
        %1701 = vmatmul.f32.gmra.mxu0 %v1587
        %v1702 = vpop.f32.mrf.mxu0
        %v1703 = vadd.f32 0.0, %v1702
        %1704 = vdwg.mxu0
        %v1705 = vadd.f32 %v1549, %v1610
        %v1706 = vadd.f32 %v1550, %v1613
        %v1707 = vadd.f32 %v1551, %v1616
        %v1708 = vadd.f32 %v1552, %v1619
        %v1709 = vadd.f32 %v1553, %v1622
        %v1710 = vadd.f32 %v1554, %v1625
        %v1711 = vadd.f32 %v1555, %v1628
        %v1712 = vadd.f32 %v1556, %v1631
        %v1713 = vadd.f32 %v1557, %v1634
        %v1714 = vadd.f32 %v1558, %v1637
        %v1715 = vadd.f32 %v1559, %v1640
        %v1716 = vadd.f32 %v1560, %v1643
        %v1717 = vadd.f32 %v1561, %v1646
        %v1718 = vadd.f32 %v1562, %v1649
        %v1719 = vadd.f32 %v1563, %v1652
        %v1720 = vadd.f32 %v1564, %v1655
        %v1721 = vadd.f32 %v1565, %v1658
        %v1722 = vadd.f32 %v1566, %v1661
        %v1723 = vadd.f32 %v1567, %v1664
        %v1724 = vadd.f32 %v1568, %v1667
        %v1725 = vadd.f32 %v1569, %v1670
        %v1726 = vadd.f32 %v1570, %v1673
        %v1727 = vadd.f32 %v1571, %v1676
        %v1728 = vadd.f32 %v1572, %v1679
        %v1729 = vadd.f32 %v1573, %v1682
        %v1730 = vadd.f32 %v1574, %v1685
        %v1731 = vadd.f32 %v1575, %v1688
        %v1732 = vadd.f32 %v1576, %v1691
        %v1733 = vadd.f32 %v1577, %v1694
        %v1734 = vadd.f32 %v1578, %v1697
        %v1735 = vadd.f32 %v1579, %v1700
        %v1736 = vadd.f32 %v1580, %v1703
        %v1738 = vrot.slane %v314, 1
        %v1739 = vrot.slane %v315, 1
        %v1740 = vsel %vm366, %v1738, %v1739
        %v1741 = vrot.slane %v316, 1
        %v1742 = vsel %vm366, %v1739, %v1741
        %s1743 = scalar_lea.vmem %s1, 28
        %v1744 = vld [vmem:[%s1743] sm:$0x7]
        %v1745 = vsel %vm449, %v1740, 0
        %v1747 = vsel %vm449, %v1742, 0
        %v1750 = vsel %vm514, %v1744, 0
        %1752 = vmatpush.msra.mxu0 0.0
        %1753 = vmatpush.msra.mxu0 0.0
        %1754 = vmatpush.msra.mxu0 0.0
        %1755 = vmatpush.msra.mxu0 0.0
        %1756 = vmatpush.msra.mxu0 0.0
        %1757 = vmatpush.msra.mxu0 0.0
        %1758 = vmatpush.msra.mxu0 0.0
        %1759 = vmatpush.msra.mxu0 0.0
        %1760 = vmatpush.msra.mxu0 0.0
        %1761 = vmatpush.msra.mxu0 0.0
        %1762 = vmatpush.msra.mxu0 0.0
        %1763 = vmatpush.msra.mxu0 0.0
        %1764 = vmatpush.msra.mxu0 0.0
        %1765 = vmatpush.msra.mxu0 0.0
        %1766 = vmatpush.msra.mxu0 0.0
        %1767 = vmatpush.msra.mxu0 %v1750
        %1768 = vmatmul.f32.gmra.mxu0 %v458
        %v1769 = vpop.f32.mrf.mxu0
        %v1770 = vadd.f32 0.0, %v1769
        %1771 = vmatmul.f32.gmra.mxu0 %v460
        %v1772 = vpop.f32.mrf.mxu0
        %v1773 = vadd.f32 0.0, %v1772
        %1774 = vmatmul.f32.gmra.mxu0 %v462
        %v1775 = vpop.f32.mrf.mxu0
        %v1776 = vadd.f32 0.0, %v1775
        %1777 = vmatmul.f32.gmra.mxu0 %v464
        %v1778 = vpop.f32.mrf.mxu0
        %v1779 = vadd.f32 0.0, %v1778
        %1780 = vmatmul.f32.gmra.mxu0 %v466
        %v1781 = vpop.f32.mrf.mxu0
        %v1782 = vadd.f32 0.0, %v1781
        %1783 = vmatmul.f32.gmra.mxu0 %v468
        %v1784 = vpop.f32.mrf.mxu0
        %v1785 = vadd.f32 0.0, %v1784
        %1786 = vmatmul.f32.gmra.mxu0 %v470
        %v1787 = vpop.f32.mrf.mxu0
        %v1788 = vadd.f32 0.0, %v1787
        %1789 = vmatmul.f32.gmra.mxu0 %v472
        %v1790 = vpop.f32.mrf.mxu0
        %v1791 = vadd.f32 0.0, %v1790
        %1792 = vmatmul.f32.gmra.mxu0 %v474
        %v1793 = vpop.f32.mrf.mxu0
        %v1794 = vadd.f32 0.0, %v1793
        %1795 = vmatmul.f32.gmra.mxu0 %v476
        %v1796 = vpop.f32.mrf.mxu0
        %v1797 = vadd.f32 0.0, %v1796
        %1798 = vmatmul.f32.gmra.mxu0 %v478
        %v1799 = vpop.f32.mrf.mxu0
        %v1800 = vadd.f32 0.0, %v1799
        %1801 = vmatmul.f32.gmra.mxu0 %v480
        %v1802 = vpop.f32.mrf.mxu0
        %v1803 = vadd.f32 0.0, %v1802
        %1804 = vmatmul.f32.gmra.mxu0 %v482
        %v1805 = vpop.f32.mrf.mxu0
        %v1806 = vadd.f32 0.0, %v1805
        %1807 = vmatmul.f32.gmra.mxu0 %v484
        %v1808 = vpop.f32.mrf.mxu0
        %v1809 = vadd.f32 0.0, %v1808
        %1810 = vmatmul.f32.gmra.mxu0 %v486
        %v1811 = vpop.f32.mrf.mxu0
        %v1812 = vadd.f32 0.0, %v1811
        %1813 = vmatmul.f32.gmra.mxu0 %v488
        %v1814 = vpop.f32.mrf.mxu0
        %v1815 = vadd.f32 0.0, %v1814
        %1816 = vmatmul.f32.gmra.mxu0 %v490
        %v1817 = vpop.f32.mrf.mxu0
        %v1818 = vadd.f32 0.0, %v1817
        %1819 = vmatmul.f32.gmra.mxu0 %v492
        %v1820 = vpop.f32.mrf.mxu0
        %v1821 = vadd.f32 0.0, %v1820
        %1822 = vmatmul.f32.gmra.mxu0 %v494
        %v1823 = vpop.f32.mrf.mxu0
        %v1824 = vadd.f32 0.0, %v1823
        %1825 = vmatmul.f32.gmra.mxu0 %v496
        %v1826 = vpop.f32.mrf.mxu0
        %v1827 = vadd.f32 0.0, %v1826
        %1828 = vmatmul.f32.gmra.mxu0 %v498
        %v1829 = vpop.f32.mrf.mxu0
        %v1830 = vadd.f32 0.0, %v1829
        %1831 = vmatmul.f32.gmra.mxu0 %v500
        %v1832 = vpop.f32.mrf.mxu0
        %v1833 = vadd.f32 0.0, %v1832
        %1834 = vmatmul.f32.gmra.mxu0 %v502
        %v1835 = vpop.f32.mrf.mxu0
        %v1836 = vadd.f32 0.0, %v1835
        %1837 = vmatmul.f32.gmra.mxu0 %v504
        %v1838 = vpop.f32.mrf.mxu0
        %v1839 = vadd.f32 0.0, %v1838
        %1840 = vmatmul.f32.gmra.mxu0 %v506
        %v1841 = vpop.f32.mrf.mxu0
        %v1842 = vadd.f32 0.0, %v1841
        %1843 = vmatmul.f32.gmra.mxu0 %v508
        %v1844 = vpop.f32.mrf.mxu0
        %v1845 = vadd.f32 0.0, %v1844
        %1846 = vmatmul.f32.gmra.mxu0 %v510
        %v1847 = vpop.f32.mrf.mxu0
        %v1848 = vadd.f32 0.0, %v1847
        %1849 = vmatmul.f32.gmra.mxu0 %v512
        %v1850 = vpop.f32.mrf.mxu0
        %v1851 = vadd.f32 0.0, %v1850
        %1852 = vmatmul.f32.gmra.mxu0 %v1270
        %v1853 = vpop.f32.mrf.mxu0
        %v1854 = vadd.f32 0.0, %v1853
        %1855 = vmatmul.f32.gmra.mxu0 %v1272
        %v1856 = vpop.f32.mrf.mxu0
        %v1857 = vadd.f32 0.0, %v1856
        %1858 = vmatmul.f32.gmra.mxu0 %v1745
        %v1859 = vpop.f32.mrf.mxu0
        %v1860 = vadd.f32 0.0, %v1859
        %1861 = vmatmul.f32.gmra.mxu0 %v1747
        %v1862 = vpop.f32.mrf.mxu0
        %v1863 = vadd.f32 0.0, %v1862
        %1864 = vdwg.mxu0
        %v1865 = vadd.f32 %v1705, %v1770
        %v1866 = vadd.f32 %v1706, %v1773
        %v1867 = vadd.f32 %v1707, %v1776
        %v1868 = vadd.f32 %v1708, %v1779
        %v1869 = vadd.f32 %v1709, %v1782
        %v1870 = vadd.f32 %v1710, %v1785
        %v1871 = vadd.f32 %v1711, %v1788
        %v1872 = vadd.f32 %v1712, %v1791
        %v1873 = vadd.f32 %v1713, %v1794
        %v1874 = vadd.f32 %v1714, %v1797
        %v1875 = vadd.f32 %v1715, %v1800
        %v1876 = vadd.f32 %v1716, %v1803
        %v1877 = vadd.f32 %v1717, %v1806
        %v1878 = vadd.f32 %v1718, %v1809
        %v1879 = vadd.f32 %v1719, %v1812
        %v1880 = vadd.f32 %v1720, %v1815
        %v1881 = vadd.f32 %v1721, %v1818
        %v1882 = vadd.f32 %v1722, %v1821
        %v1883 = vadd.f32 %v1723, %v1824
        %v1884 = vadd.f32 %v1724, %v1827
        %v1885 = vadd.f32 %v1725, %v1830
        %v1886 = vadd.f32 %v1726, %v1833
        %v1887 = vadd.f32 %v1727, %v1836
        %v1888 = vadd.f32 %v1728, %v1839
        %v1889 = vadd.f32 %v1729, %v1842
        %v1890 = vadd.f32 %v1730, %v1845
        %v1891 = vadd.f32 %v1731, %v1848
        %v1892 = vadd.f32 %v1732, %v1851
        %v1893 = vadd.f32 %v1733, %v1854
        %v1894 = vadd.f32 %v1734, %v1857
        %v1895 = vadd.f32 %v1735, %v1860
        %v1896 = vadd.f32 %v1736, %v1863
        %v1897 = vrot.slane %v314, 2
        %v1898 = vrot.slane %v315, 2
        %v1899 = vsel %vm811, %v1897, %v1898
        %v1900 = vrot.slane %v316, 2
        %v1901 = vsel %vm811, %v1898, %v1900
        %s1902 = scalar_lea.vmem %s1, 32
        %v1903 = vld [vmem:[%s1902] sm:$0x7]
        %v1904 = vsel %vm449, %v1899, 0
        %v1906 = vsel %vm449, %v1901, 0
        %v1909 = vsel %vm514, %v1903, 0
        %1911 = vmatpush.msra.mxu0 0.0
        %1912 = vmatpush.msra.mxu0 0.0
        %1913 = vmatpush.msra.mxu0 0.0
        %1914 = vmatpush.msra.mxu0 0.0
        %1915 = vmatpush.msra.mxu0 0.0
        %1916 = vmatpush.msra.mxu0 0.0
        %1917 = vmatpush.msra.mxu0 0.0
        %1918 = vmatpush.msra.mxu0 0.0
        %1919 = vmatpush.msra.mxu0 0.0
        %1920 = vmatpush.msra.mxu0 0.0
        %1921 = vmatpush.msra.mxu0 0.0
        %1922 = vmatpush.msra.mxu0 0.0
        %1923 = vmatpush.msra.mxu0 0.0
        %1924 = vmatpush.msra.mxu0 0.0
        %1925 = vmatpush.msra.mxu0 0.0
        %1926 = vmatpush.msra.mxu0 %v1909
        %1927 = vmatmul.f32.gmra.mxu0 %v902
        %v1928 = vpop.f32.mrf.mxu0
        %v1929 = vadd.f32 0.0, %v1928
        %1930 = vmatmul.f32.gmra.mxu0 %v904
        %v1931 = vpop.f32.mrf.mxu0
        %v1932 = vadd.f32 0.0, %v1931
        %1933 = vmatmul.f32.gmra.mxu0 %v906
        %v1934 = vpop.f32.mrf.mxu0
        %v1935 = vadd.f32 0.0, %v1934
        %1936 = vmatmul.f32.gmra.mxu0 %v908
        %v1937 = vpop.f32.mrf.mxu0
        %v1938 = vadd.f32 0.0, %v1937
        %1939 = vmatmul.f32.gmra.mxu0 %v910
        %v1940 = vpop.f32.mrf.mxu0
        %v1941 = vadd.f32 0.0, %v1940
        %1942 = vmatmul.f32.gmra.mxu0 %v912
        %v1943 = vpop.f32.mrf.mxu0
        %v1944 = vadd.f32 0.0, %v1943
        %1945 = vmatmul.f32.gmra.mxu0 %v914
        %v1946 = vpop.f32.mrf.mxu0
        %v1947 = vadd.f32 0.0, %v1946
        %1948 = vmatmul.f32.gmra.mxu0 %v916
        %v1949 = vpop.f32.mrf.mxu0
        %v1950 = vadd.f32 0.0, %v1949
        %1951 = vmatmul.f32.gmra.mxu0 %v918
        %v1952 = vpop.f32.mrf.mxu0
        %v1953 = vadd.f32 0.0, %v1952
        %1954 = vmatmul.f32.gmra.mxu0 %v920
        %v1955 = vpop.f32.mrf.mxu0
        %v1956 = vadd.f32 0.0, %v1955
        %1957 = vmatmul.f32.gmra.mxu0 %v922
        %v1958 = vpop.f32.mrf.mxu0
        %v1959 = vadd.f32 0.0, %v1958
        %1960 = vmatmul.f32.gmra.mxu0 %v924
        %v1961 = vpop.f32.mrf.mxu0
        %v1962 = vadd.f32 0.0, %v1961
        %1963 = vmatmul.f32.gmra.mxu0 %v926
        %v1964 = vpop.f32.mrf.mxu0
        %v1965 = vadd.f32 0.0, %v1964
        %1966 = vmatmul.f32.gmra.mxu0 %v928
        %v1967 = vpop.f32.mrf.mxu0
        %v1968 = vadd.f32 0.0, %v1967
        %1969 = vmatmul.f32.gmra.mxu0 %v930
        %v1970 = vpop.f32.mrf.mxu0
        %v1971 = vadd.f32 0.0, %v1970
        %1972 = vmatmul.f32.gmra.mxu0 %v932
        %v1973 = vpop.f32.mrf.mxu0
        %v1974 = vadd.f32 0.0, %v1973
        %1975 = vmatmul.f32.gmra.mxu0 %v934
        %v1976 = vpop.f32.mrf.mxu0
        %v1977 = vadd.f32 0.0, %v1976
        %1978 = vmatmul.f32.gmra.mxu0 %v936
        %v1979 = vpop.f32.mrf.mxu0
        %v1980 = vadd.f32 0.0, %v1979
        %1981 = vmatmul.f32.gmra.mxu0 %v938
        %v1982 = vpop.f32.mrf.mxu0
        %v1983 = vadd.f32 0.0, %v1982
        %1984 = vmatmul.f32.gmra.mxu0 %v940
        %v1985 = vpop.f32.mrf.mxu0
        %v1986 = vadd.f32 0.0, %v1985
        %1987 = vmatmul.f32.gmra.mxu0 %v942
        %v1988 = vpop.f32.mrf.mxu0
        %v1989 = vadd.f32 0.0, %v1988
        %1990 = vmatmul.f32.gmra.mxu0 %v944
        %v1991 = vpop.f32.mrf.mxu0
        %v1992 = vadd.f32 0.0, %v1991
        %1993 = vmatmul.f32.gmra.mxu0 %v946
        %v1994 = vpop.f32.mrf.mxu0
        %v1995 = vadd.f32 0.0, %v1994
        %1996 = vmatmul.f32.gmra.mxu0 %v948
        %v1997 = vpop.f32.mrf.mxu0
        %v1998 = vadd.f32 0.0, %v1997
        %1999 = vmatmul.f32.gmra.mxu0 %v950
        %v2000 = vpop.f32.mrf.mxu0
        %v2001 = vadd.f32 0.0, %v2000
        %2002 = vmatmul.f32.gmra.mxu0 %v952
        %v2003 = vpop.f32.mrf.mxu0
        %v2004 = vadd.f32 0.0, %v2003
        %2005 = vmatmul.f32.gmra.mxu0 %v954
        %v2006 = vpop.f32.mrf.mxu0
        %v2007 = vadd.f32 0.0, %v2006
        %2008 = vmatmul.f32.gmra.mxu0 %v956
        %v2009 = vpop.f32.mrf.mxu0
        %v2010 = vadd.f32 0.0, %v2009
        %2011 = vmatmul.f32.gmra.mxu0 %v1429
        %v2012 = vpop.f32.mrf.mxu0
        %v2013 = vadd.f32 0.0, %v2012
        %2014 = vmatmul.f32.gmra.mxu0 %v1431
        %v2015 = vpop.f32.mrf.mxu0
        %v2016 = vadd.f32 0.0, %v2015
        %2017 = vmatmul.f32.gmra.mxu0 %v1904
        %v2018 = vpop.f32.mrf.mxu0
        %v2019 = vadd.f32 0.0, %v2018
        %2020 = vmatmul.f32.gmra.mxu0 %v1906
        %v2021 = vpop.f32.mrf.mxu0
        %v2022 = vadd.f32 0.0, %v2021
        %2023 = vdwg.mxu0
        %v2024 = vadd.f32 %v1865, %v1929
        %v2025 = vadd.f32 %v1866, %v1932
        %v2026 = vadd.f32 %v1867, %v1935
        %v2027 = vadd.f32 %v1868, %v1938
        %v2028 = vadd.f32 %v1869, %v1941
        %v2029 = vadd.f32 %v1870, %v1944
        %v2030 = vadd.f32 %v1871, %v1947
        %v2031 = vadd.f32 %v1872, %v1950
        %v2032 = vadd.f32 %v1873, %v1953
        %v2033 = vadd.f32 %v1874, %v1956
        %v2034 = vadd.f32 %v1875, %v1959
        %v2035 = vadd.f32 %v1876, %v1962
        %v2036 = vadd.f32 %v1877, %v1965
        %v2037 = vadd.f32 %v1878, %v1968
        %v2038 = vadd.f32 %v1879, %v1971
        %v2039 = vadd.f32 %v1880, %v1974
        %v2040 = vadd.f32 %v1881, %v1977
        %v2041 = vadd.f32 %v1882, %v1980
        %v2042 = vadd.f32 %v1883, %v1983
        %v2043 = vadd.f32 %v1884, %v1986
        %v2044 = vadd.f32 %v1885, %v1989
        %v2045 = vadd.f32 %v1886, %v1992
        %v2046 = vadd.f32 %v1887, %v1995
        %v2047 = vadd.f32 %v1888, %v1998
        %v2048 = vadd.f32 %v1889, %v2001
        %v2049 = vadd.f32 %v1890, %v2004
        %v2050 = vadd.f32 %v1891, %v2007
        %v2051 = vadd.f32 %v1892, %v2010
        %v2052 = vadd.f32 %v1893, %v2013
        %v2053 = vadd.f32 %v1894, %v2016
        %v2054 = vadd.f32 %v1895, %v2019
        %v2055 = vadd.f32 %v1896, %v2022
        %v2056 = vld [vmem:[%s2] sm:$0x1]
        %v2058 = vperm.slane %v2056, 0
        %v2060 = vadd.f32 %v2024, %v2058
        %v2061 = vadd.f32 %v2025, %v2058
        %v2062 = vadd.f32 %v2026, %v2058
        %v2063 = vadd.f32 %v2027, %v2058
        %v2064 = vadd.f32 %v2028, %v2058
        %v2065 = vadd.f32 %v2029, %v2058
        %v2066 = vadd.f32 %v2030, %v2058
        %v2067 = vadd.f32 %v2031, %v2058
        %v2068 = vadd.f32 %v2032, %v2058
        %v2069 = vadd.f32 %v2033, %v2058
        %v2070 = vadd.f32 %v2034, %v2058
        %v2071 = vadd.f32 %v2035, %v2058
        %v2072 = vadd.f32 %v2036, %v2058
        %v2073 = vadd.f32 %v2037, %v2058
        %v2074 = vadd.f32 %v2038, %v2058
        %v2075 = vadd.f32 %v2039, %v2058
        %v2076 = vadd.f32 %v2040, %v2058
        %v2077 = vadd.f32 %v2041, %v2058
        %v2078 = vadd.f32 %v2042, %v2058
        %v2079 = vadd.f32 %v2043, %v2058
        %v2080 = vadd.f32 %v2044, %v2058
        %v2081 = vadd.f32 %v2045, %v2058
        %v2082 = vadd.f32 %v2046, %v2058
        %v2083 = vadd.f32 %v2047, %v2058
        %v2084 = vadd.f32 %v2048, %v2058
        %v2085 = vadd.f32 %v2049, %v2058
        %v2086 = vadd.f32 %v2050, %v2058
        %v2087 = vadd.f32 %v2051, %v2058
        %v2088 = vadd.f32 %v2052, %v2058
        %v2089 = vadd.f32 %v2053, %v2058
        %v2090 = vadd.f32 %v2054, %v2058
        %v2091 = vadd.f32 %v2055, %v2058
        %v2092 = vmax.f32 %v2060, 0.0
        %v2093 = vmax.f32 %v2061, 0.0
        %v2094 = vmax.f32 %v2062, 0.0
        %v2095 = vmax.f32 %v2063, 0.0
        %v2096 = vmax.f32 %v2064, 0.0
        %v2097 = vmax.f32 %v2065, 0.0
        %v2098 = vmax.f32 %v2066, 0.0
        %v2099 = vmax.f32 %v2067, 0.0
        %v2100 = vmax.f32 %v2068, 0.0
        %v2101 = vmax.f32 %v2069, 0.0
        %v2102 = vmax.f32 %v2070, 0.0
        %v2103 = vmax.f32 %v2071, 0.0
        %v2104 = vmax.f32 %v2072, 0.0
        %v2105 = vmax.f32 %v2073, 0.0
        %v2106 = vmax.f32 %v2074, 0.0
        %v2107 = vmax.f32 %v2075, 0.0
        %v2108 = vmax.f32 %v2076, 0.0
        %v2109 = vmax.f32 %v2077, 0.0
        %v2110 = vmax.f32 %v2078, 0.0
        %v2111 = vmax.f32 %v2079, 0.0
        %v2112 = vmax.f32 %v2080, 0.0
        %v2113 = vmax.f32 %v2081, 0.0
        %v2114 = vmax.f32 %v2082, 0.0
        %v2115 = vmax.f32 %v2083, 0.0
        %v2116 = vmax.f32 %v2084, 0.0
        %v2117 = vmax.f32 %v2085, 0.0
        %v2118 = vmax.f32 %v2086, 0.0
        %v2119 = vmax.f32 %v2087, 0.0
        %v2120 = vmax.f32 %v2088, 0.0
        %v2121 = vmax.f32 %v2089, 0.0
        %v2122 = vmax.f32 %v2090, 0.0
        %v2123 = vmax.f32 %v2091, 0.0
        %2124 = vmatpush.msra.mxu0 %v2107
        %2125 = vmatpush.msra.mxu0 %v2106
        %2126 = vmatpush.msra.mxu0 %v2105
        %2127 = vmatpush.msra.mxu0 %v2104
        %2128 = vmatpush.msra.mxu0 %v2103
        %2129 = vmatpush.msra.mxu0 %v2102
        %2130 = vmatpush.msra.mxu0 %v2101
        %2131 = vmatpush.msra.mxu0 %v2100
        %2132 = vmatpush.msra.mxu0 %v2099
        %2133 = vmatpush.msra.mxu0 %v2098
        %2134 = vmatpush.msra.mxu0 %v2097
        %2135 = vmatpush.msra.mxu0 %v2096
        %2136 = vmatpush.msra.mxu0 %v2095
        %2137 = vmatpush.msra.mxu0 %v2094
        %2138 = vmatpush.msra.mxu0 %v2093
        %2139 = vmatpush.msra.mxu0 %v2092
        %2140 = vmatmul.f32.gmra.mxu0 0.00390625
        %v2141 = vpop.f32.mrf.mxu0
        %v2142 = vadd.f32 0.0, %v2141
        %2143 = vdwg.mxu0
        %2144 = vmatpush.msra.mxu0 %v2123
        %2145 = vmatpush.msra.mxu0 %v2122
        %2146 = vmatpush.msra.mxu0 %v2121
        %2147 = vmatpush.msra.mxu0 %v2120
        %2148 = vmatpush.msra.mxu0 %v2119
        %2149 = vmatpush.msra.mxu0 %v2118
        %2150 = vmatpush.msra.mxu0 %v2117
        %2151 = vmatpush.msra.mxu0 %v2116
        %2152 = vmatpush.msra.mxu0 %v2115
        %2153 = vmatpush.msra.mxu0 %v2114
        %2154 = vmatpush.msra.mxu0 %v2113
        %2155 = vmatpush.msra.mxu0 %v2112
        %2156 = vmatpush.msra.mxu0 %v2111
        %2157 = vmatpush.msra.mxu0 %v2110
        %2158 = vmatpush.msra.mxu0 %v2109
        %2159 = vmatpush.msra.mxu0 %v2108
        %2160 = vmatmul.f32.gmra.mxu0 0.00390625
        %v2161 = vpop.f32.mrf.mxu0
        %v2162 = vadd.f32 %v2142, %v2161
        %2163 = vdwg.mxu0
        %v2164 = vld [vmem:[%s3] sm:$0xff]
        %v2165 = vld [vmem:[%s3 + $0x8] sm:$0xff]
        %v2166 = vld [vmem:[%s3 + $0x10] sm:$0xff]
        %v2167 = vld [vmem:[%s3 + $0x18] sm:$0xff]
        %v2168 = vld [vmem:[%s3 + $0x20] sm:$0xff]
        %v2169 = vld [vmem:[%s3 + $0x28] sm:$0xff]
        %v2170 = vld [vmem:[%s3 + $0x30] sm:$0xff]
        %v2171 = vld [vmem:[%s3 + $0x38] sm:$0xff]
        %v2172 = vld [vmem:[%s3 + $0x40] sm:$0xff]
        %v2173 = vld [vmem:[%s3 + $0x48] sm:$0xff]
        %v2174 = vld [vmem:[%s3 + $0x50] sm:$0xff]
        %v2175 = vld [vmem:[%s3 + $0x58] sm:$0xff]
        %v2176 = vld [vmem:[%s3 + $0x60] sm:$0xff]
        %v2177 = vld [vmem:[%s3 + $0x68] sm:$0xff]
        %v2178 = vld [vmem:[%s3 + $0x70] sm:$0xff]
        %v2179 = vld [vmem:[%s3 + $0x78] sm:$0xff]
        %v2180 = vld [vmem:[%s4] sm:$0x1]
        %2181 = vmatpush.msra.mxu0 %v2179
        %2182 = vmatpush.msra.mxu0 %v2178
        %2183 = vmatpush.msra.mxu0 %v2177
        %2184 = vmatpush.msra.mxu0 %v2176
        %2185 = vmatpush.msra.mxu0 %v2175
        %2186 = vmatpush.msra.mxu0 %v2174
        %2187 = vmatpush.msra.mxu0 %v2173
        %2188 = vmatpush.msra.mxu0 %v2172
        %2189 = vmatpush.msra.mxu0 %v2171
        %2190 = vmatpush.msra.mxu0 %v2170
        %2191 = vmatpush.msra.mxu0 %v2169
        %2192 = vmatpush.msra.mxu0 %v2168
        %2193 = vmatpush.msra.mxu0 %v2167
        %2194 = vmatpush.msra.mxu0 %v2166
        %2195 = vmatpush.msra.mxu0 %v2165
        %2196 = vmatpush.msra.mxu0 %v2164
        %2197 = vmatmul.f32.gmra.mxu0 %v2162
        %v2198 = vpop.f32.mrf.mxu0
        %v2199 = vadd.f32 %v2180, %v2198
        %2200 = vdwg.mxu0
        %v2201 = vmax.f32 %v2199, 0.0
        %v2202 = vld [vmem:[%s262] sm:$0x1]
        %v2203 = vmul.f32 %v2201, %v2202
        %2204 = vst [vmem:[%s254] sm:$0x1] %v2203
        %s2205 = sand.u32 %s164, 1
        %s2206 = scalar_lea.sflag [#allocation3], %s2205
        %s2207 = sand.u32 %s164, 1
        %s2208 = scalar_lea.vmem [#allocation2], %s2207
        // Predicated region
        $region45: #{encoder_forward.1} parent=43 // pred_check
          %p2209 = pneg %p174
        $region46: #{encoder_forward.1} parent=43 // pred_check_branch
          %2211 = sbr.rel (%p2209) target = $region48
        $region47: #{encoder_forward.1} parent=43 // pred_region
          %2213 = vsyncadd %s2206, 0
          %s2214 = scalar_lea.hbm %s6, %s20
          %s2216 = sshll.u32 %s2208, 4
          %s2217 = int_to_ptr.vmem [resolvable:$true] %s2216
          %s2218 = sshll.u32 %s2214, 4
          %s2219 = int_to_ptr.hbm [resolvable:$true] %s2218
          %2221 = dma.vmem_to_hbm [thread:$0]  %s2217, 16, %s2219, %s2206
        $region48: #{encoder_forward.1} parent=43 // pred_fallthru
          _
      $region44: #{encoder_forward.1} parent=5 // pred_fallthru
        _
      %p2222 = scmp.le.s32.totalorder 2, %s15
      // Predicated region
      $region49: #{encoder_forward.1} parent=5 // pred_check
        %p2223 = pneg %p2222
      $region50: #{encoder_forward.1} parent=5 // pred_check_branch
        %2225 = sbr.rel (%p2223) target = $region52
      $region51: #{encoder_forward.1} parent=5 // pred_region
        %s2226 = ssub.s32 %s15, 2
        // Predicated region
        $region53: #{encoder_forward.1} parent=51 // pred_check
          %p2227 = pneg %p180
        $region54: #{encoder_forward.1} parent=51 // pred_check_branch
          %2229 = sbr.rel (%p2227) target = $region56
        $region55: #{encoder_forward.1} parent=51 // pred_region
          %s2230 = sand.u32 %s165, 1
          %s2231 = scalar_lea.sflag [#allocation3], %s2230
          %s2232 = sand.u32 %s165, 1
          %s2233 = scalar_lea.vmem [#allocation2], %s2232
          %2235 = dma.done %s2231, 16
        $region56: #{encoder_forward.1} parent=51 // pred_fallthru
          _
      $region52: #{encoder_forward.1} parent=5 // pred_fallthru
        _
    $region6: #{encoder_forward.1} parent=1 // loop_footer
      %s19 = sadd.s32 1, %s15
    $region7: #{encoder_forward.1} parent=1 // loop_footer_branch
      %14 = sbr.rel target = $region3
    $region8: #{encoder_forward.1} parent=1 // loop_exit
      _
    %2236 = vsyncpa [#allocation3], 1
    %s2237 = scalar_lea.sflag [#allocation3], 1
    %2238 = vsyncpa %s2237, 1

</llo_original>
